<compile_context>
chip_gen: v6e
topology: v6e:2x2x1
jax: 0.10.0
libtpu: 0.0.40
codegen_flags: <defaults>
</compile_context>

<pallas_src>
import functools

import jax
import jax.numpy as jnp
from jax.experimental import pallas as pl
from jax.experimental.pallas import tpu as pltpu

KSIZE = 7
PAD = 3


def _cbam_kernel(x_ref, m_ref, w_ref, b_ref, rt_ref, rf_ref, o_ref, *,
                 btile, H, W):
    """One grid step: `btile` batches; rows = (batch, channel), lanes = H*W.

    x_ref : (btile*Cp, HW)      lane-dense input block
    m_ref : (HW, Hp+Wp)         pooling matrix, conv zero-padding baked in
    w_ref : (2K, Pp, Cp)        taps k<K: time conv, k>=K: freq conv
    b_ref : (Pp, H+W)           bias, cols [0,H)=bt, [H,H+W)=bf
    rt_ref: (H, HW)             time-gate expansion (0.5 folded in)
    rf_ref: (W, HW)             freq-gate expansion (0.5 folded in)
    o_ref : (btile*Cp, HW)      output block
    """
    Rb, HW = x_ref.shape
    Cp = Rb // btile                      # padded channels (== padded planes)
    Pp = Cp
    K = w_ref.shape[0] // 2
    Hp = H + 2 * PAD                      # padded pooled length (time branch)

    x = x_ref[...]                                                      # (Rb, HW)

    # Both average pools + conv zero padding for every (batch, channel) row in
    # ONE lane-contraction matmul.
    pools = jnp.dot(x, m_ref[...], preferred_element_type=jnp.float32)  # (Rb, Hp+Wp)
    pools3 = pools.reshape(btile, Cp, pools.shape[-1])                  # free: Cp % 8 == 0

    w = w_ref[...]                                                      # (2K, Pp, Cp)
    bias = b_ref[...]                                                   # (Pp, H+W)

    # 7-tap convs: one batched channel-contraction matmul per tap and branch.
    # Taps are read as static lane slices of the pre-padded pools — no scratch
    # im2col, no concatenate, no zero-fill inside the kernel.
    conv_t = jnp.broadcast_to(bias[None, :, :H], (btile, Pp, H))
    conv_f = jnp.broadcast_to(bias[None, :, H:], (btile, Pp, W))
    for k in range(K):
        wt_k = jnp.broadcast_to(w[k][None], (btile, Pp, Cp))
        wf_k = jnp.broadcast_to(w[K + k][None], (btile, Pp, Cp))
        conv_t = conv_t + jnp.einsum('bpc,bch->bph', wt_k,
                                     pools3[:, :, k:k + H],
                                     preferred_element_type=jnp.float32)
        conv_f = conv_f + jnp.einsum('bpc,bcw->bpw', wf_k,
                                     pools3[:, :, Hp + k:Hp + k + W],
                                     preferred_element_type=jnp.float32)

    sig_t = jax.nn.sigmoid(conv_t).reshape(btile * Pp, H)               # (Rb, H)
    sig_f = jax.nn.sigmoid(conv_f).reshape(btile * Pp, W)               # (Rb, W)

    # Expand both gates directly to the lane-dense (Rb, HW) layout (0.5 average
    # folded into rt/rf) and apply with a single full-size multiply.
    gate = (jnp.dot(sig_t, rt_ref[...], preferred_element_type=jnp.float32) +
            jnp.dot(sig_f, rf_ref[...], preferred_element_type=jnp.float32))
    o_ref[...] = (x * gate).astype(o_ref.dtype)


def _pick_batch_tile(batch, bytes_per_batch, const_bytes):
    """Generation-aware batch tile + VMEM limit."""
    try:
        vmem_cap = int(pltpu.get_tpu_info().vmem_capacity_bytes)
    except Exception:                     # unknown target / interpret mode
        vmem_cap = 64 << 20
    # 64 MiB parts (v7x) have 2 TensorCores -> keep >= 2 parallel grid steps.
    # 128 MiB parts (v5e/v6e) have a single TC -> biggest block that fits.
    dual_core = vmem_cap < (100 << 20)
    vmem_limit = int(min((vmem_cap * 3) // 4, 96 << 20))
    # Per step: x-block + out-block, each double buffered (~4x block), plus the
    # gate / product temporaries (~2-3x more) -> ~1/7 of what the constants
    # leave over.
    usable = max(vmem_limit - 2 * const_bytes, 1 << 20)
    btile = max(1, usable // (7 * max(bytes_per_batch, 1)))
    btile = min(int(btile), int(batch))
    if dual_core and batch >= 2:
        btile = min(btile, (batch + 1) // 2)
    return int(btile), vmem_limit


def cbam_pallas(x, wt, bt, wf, bf):
    """x: (B, C, H, W) f32; wt/wf: (P, C, 7); bt/bf: (P,). Requires P == C."""
    B, C, H, W = x.shape
    P, Cw, K = wt.shape
    assert K == KSIZE and Cw == C
    assert P == C, "CBAM gate broadcast requires planes == inplanes"
    HW = H * W
    Hp, Wp = H + 2 * PAD, W + 2 * PAD

    # Channel padding to a multiple of 8 (sublane alignment).  No-op (and no
    # extra HBM traffic) when C % 8 == 0, the usual production case.
    Cp = -(-C // 8) * 8
    if Cp != C:
        x = jnp.pad(x, ((0, 0), (0, Cp - C), (0, 0), (0, 0)))
        wt = jnp.pad(wt, ((0, Cp - P), (0, Cp - C), (0, 0)))
        wf = jnp.pad(wf, ((0, Cp - P), (0, Cp - C), (0, 0)))
        bt = jnp.pad(bt, ((0, Cp - P),))
        bf = jnp.pad(bf, ((0, Cp - P),))

    x_flat = x.reshape(B * Cp, HW)        # rows = (batch, channel); lane-dense HW

    # ---- host-side constants ------------------------------------------------
    j = jnp.arange(HW)
    row = j // W
    col = j % W
    # Pooling matrix with the conv zero-padding baked in (zero columns for the
    # out-of-range pad positions).
    m_t = (row[:, None] == (jnp.arange(Hp) - PAD)[None, :]).astype(jnp.float32) / W
    m_f = (col[:, None] == (jnp.arange(Wp) - PAD)[None, :]).astype(jnp.float32) / H
    m = jnp.concatenate([m_t, m_f], axis=1)                           # (HW, Hp+Wp)
    # Gate-expansion matrices with the final 0.5 average folded in.
    rt = 0.5 * (jnp.arange(H)[:, None] == row[None, :]).astype(jnp.float32)  # (H, HW)
    rf = 0.5 * (jnp.arange(W)[:, None] == col[None, :]).astype(jnp.float32)  # (W, HW)
    # Weights (Pp, Cp, K) -> (K, Pp, Cp), time taps then freq taps.
    w_all = jnp.concatenate([jnp.transpose(wt, (2, 0, 1)),
                             jnp.transpose(wf, (2, 0, 1))], axis=0)   # (2K, Pp, Cp)
    # Bias as one lane-dense (Pp, H+W) slab.
    bias = jnp.concatenate([jnp.broadcast_to(bt[:, None], (Cp, H)),
                            jnp.broadcast_to(bf[:, None], (Cp, W))], axis=1)

    bytes_per_batch = Cp * HW * x.dtype.itemsize
    const_bytes = 4 * (m.size + rt.size + rf.size + w_all.size + bias.size)
    btile, vmem_limit = _pick_batch_tile(B, bytes_per_batch, const_bytes)
    grid = (pl.cdiv(B, btile),)

    kernel = functools.partial(_cbam_kernel, btile=btile, H=H, W=W)

    out_flat = pl.pallas_call(
        kernel,
        out_shape=jax.ShapeDtypeStruct((B * Cp, HW), x.dtype),
        grid_spec=pltpu.PrefetchScalarGridSpec(
            num_scalar_prefetch=0,
            grid=grid,
            in_specs=[
                pl.BlockSpec((btile * Cp, HW), lambda b: (b, 0)),
                pl.BlockSpec((HW, Hp + Wp), lambda b: (0, 0)),
                pl.BlockSpec((2 * KSIZE, Cp, Cp), lambda b: (0, 0, 0)),
                pl.BlockSpec((Cp, H + W), lambda b: (0, 0)),
                pl.BlockSpec((H, HW), lambda b: (0, 0)),
                pl.BlockSpec((W, HW), lambda b: (0, 0)),
            ],
            out_specs=pl.BlockSpec((btile * Cp, HW), lambda b: (b, 0)),
        ),
        compiler_params=pltpu.CompilerParams(
            dimension_semantics=("parallel",),
            vmem_limit_bytes=vmem_limit,
        ),
    )(x_flat, m, w_all, bias, rt, rf)

    out = out_flat.reshape(B, Cp, H, W)
    return out[:, :C] if Cp != C else out


def cbam_ref(x, wt, bt, wf, bf):
    """Pure-JAX reference mirroring the PyTorch forward (for verification)."""
    B, C, H, W = x.shape
    # time branch
    t_pool = x.mean(axis=3)                                   # (B, C, H)
    t_pad = jnp.pad(t_pool, ((0, 0), (0, 0), (PAD, PAD)))
    t_conv = bt[None, :, None] + sum(
        jnp.einsum('pc,bch->bph', wt[:, :, k], t_pad[:, :, k:k + H])
        for k in range(KSIZE))
    t_att = jax.nn.sigmoid(t_conv)                            # (B, P, H)
    # freq branch
    f_pool = x.mean(axis=2)                                   # (B, C, W)
    f_pad = jnp.pad(f_pool, ((0, 0), (0, 0), (PAD, PAD)))
    f_conv = bf[None, :, None] + sum(
        jnp.einsum('pc,bcw->bpw', wf[:, :, k], f_pad[:, :, k:k + W])
        for k in range(KSIZE))
    f_att = jax.nn.sigmoid(f_conv)                            # (B, P, W)
    return 0.5 * (x * t_att[:, :, :, None] + x * f_att[:, :, None, :])


if __name__ == "__main__":
    # CBAM(inplanes=C, planes=C): planes must equal inplanes for the
    # broadcasted multiply `input * gate`, as in typical usage.
    B, C, H, W = 2, 4, 16, 16
    P = C

    key = jax.random.PRNGKey(0)
    kx, kwt, kbt, kwf, kbf = jax.random.split(key, 5)

    x = jax.random.normal(kx, (B, C, H, W), dtype=jnp.float32)
    # Conv2d(inplanes, planes, (7,1)) weight: (P, C, 7, 1) -> squeeze to (P, C, 7)
    wt = 0.1 * jax.random.normal(kwt, (P, C, KSIZE), dtype=jnp.float32)
    bt = 0.1 * jax.random.normal(kbt, (P,), dtype=jnp.float32)
    # Conv2d(inplanes, planes, (1,7)) weight: (P, C, 1, 7) -> squeeze to (P, C, 7)
    wf = 0.1 * jax.random.normal(kwf, (P, C, KSIZE), dtype=jnp.float32)
    bf = 0.1 * jax.random.normal(kbf, (P,), dtype=jnp.float32)

    out = cbam_pallas(x, wt, bt, wf, bf)
    out = jax.block_until_ready(out)

    ref = cbam_ref(x, wt, bt, wf, bf)
    assert out.shape == (B, C, H, W)
    assert jnp.allclose(out, ref, atol=2e-5, rtol=2e-5), "mismatch vs JAX reference"

    print("KERNEL_OK")
</pallas_src>

<mosaic_0001>
module attributes {stable_mosaic.version = 11 : i64} {
  func.func @_cbam_kernel(%arg0: i32, %arg1: memref<8x256xf32, #tpu.memory_space<vmem>>, %arg2: memref<256x44xf32, #tpu.memory_space<vmem>>, %arg3: memref<14x8x8xf32, #tpu.memory_space<vmem>>, %arg4: memref<8x32xf32, #tpu.memory_space<vmem>>, %arg5: memref<16x256xf32, #tpu.memory_space<vmem>>, %arg6: memref<16x256xf32, #tpu.memory_space<vmem>>, %arg7: memref<8x256xf32, #tpu.memory_space<vmem>>) attributes {dimension_semantics = [#tpu.dimension_semantics<parallel>], iteration_bounds = array<i64: 2>, scalar_prefetch = 0 : i64, scratch_operands = 0 : i64, tpu.core_type = #tpu.core_type<tc>, window_params = [{transform_indices = @transform_0, window_bounds = array<i64: 8, 256>}, {pipeline_mode = #tpu.pipeline_mode<synchronous>, transform_indices = @transform_1, window_bounds = array<i64: 256, 44>}, {pipeline_mode = #tpu.pipeline_mode<synchronous>, transform_indices = @transform_2, window_bounds = array<i64: 14, 8, 8>}, {pipeline_mode = #tpu.pipeline_mode<synchronous>, transform_indices = @transform_3, window_bounds = array<i64: 8, 32>}, {pipeline_mode = #tpu.pipeline_mode<synchronous>, transform_indices = @transform_4, window_bounds = array<i64: 16, 256>}, {pipeline_mode = #tpu.pipeline_mode<synchronous>, transform_indices = @transform_5, window_bounds = array<i64: 16, 256>}, {transform_indices = @transform_6, window_bounds = array<i64: 8, 256>}]} {
    %c0 = arith.constant 0 : index
    %c0_0 = arith.constant 0 : index
    %0 = vector.load %arg1[%c0, %c0_0] : memref<8x256xf32, #tpu.memory_space<vmem>>, vector<8x256xf32>
    %c0_1 = arith.constant 0 : index
    %c0_2 = arith.constant 0 : index
    %1 = vector.load %arg2[%c0_1, %c0_2] : memref<256x44xf32, #tpu.memory_space<vmem>>, vector<256x44xf32>
    %cst = arith.constant dense<0.000000e+00> : vector<8x44xf32>
    %2 = tpu.matmul %0, %1, %cst {dimension_numbers = #tpu.dot_dimension_numbers<[1], [0], [0], [1], [0, 0, 1, 1], [], []>} : vector<8x256xf32>, vector<256x44xf32>, vector<8x44xf32> -> vector<8x44xf32>
    %3 = vector.shape_cast %2 : vector<8x44xf32> to vector<1x8x44xf32>
    %c0_3 = arith.constant 0 : index
    %c0_4 = arith.constant 0 : index
    %c0_5 = arith.constant 0 : index
    %4 = vector.load %arg3[%c0_3, %c0_4, %c0_5] : memref<14x8x8xf32, #tpu.memory_space<vmem>>, vector<14x8x8xf32>
    %c0_6 = arith.constant 0 : index
    %c0_7 = arith.constant 0 : index
    %5 = vector.load %arg4[%c0_6, %c0_7] : memref<8x32xf32, #tpu.memory_space<vmem>>, vector<8x32xf32>
    %6 = vector.extract_strided_slice %5 {offsets = [0, 0], sizes = [8, 16], strides = [1, 1]} : vector<8x32xf32> to vector<8x16xf32>
    %7 = vector.shape_cast %6 : vector<8x16xf32> to vector<1x8x16xf32>
    %8 = vector.extract_strided_slice %5 {offsets = [0, 16], sizes = [8, 16], strides = [1, 1]} : vector<8x32xf32> to vector<8x16xf32>
    %9 = vector.shape_cast %8 : vector<8x16xf32> to vector<1x8x16xf32>
    %10 = vector.extract_strided_slice %4 {offsets = [0, 0, 0], sizes = [1, 8, 8], strides = [1, 1, 1]} : vector<14x8x8xf32> to vector<1x8x8xf32>
    %11 = vector.shape_cast %10 : vector<1x8x8xf32> to vector<8x8xf32>
    %12 = vector.shape_cast %11 : vector<8x8xf32> to vector<1x8x8xf32>
    %13 = vector.extract_strided_slice %4 {offsets = [7, 0, 0], sizes = [1, 8, 8], strides = [1, 1, 1]} : vector<14x8x8xf32> to vector<1x8x8xf32>
    %14 = vector.shape_cast %13 : vector<1x8x8xf32> to vector<8x8xf32>
    %15 = vector.shape_cast %14 : vector<8x8xf32> to vector<1x8x8xf32>
    %16 = vector.extract_strided_slice %3 {offsets = [0, 0, 0], sizes = [1, 8, 16], strides = [1, 1, 1]} : vector<1x8x44xf32> to vector<1x8x16xf32>
    "tpu.trace_start"() <{level = 10 : i32, message = "bpc,bch->bph"}> : () -> ()
    %cst_8 = arith.constant dense<0.000000e+00> : vector<1x8x16xf32>
    %17 = tpu.matmul %12, %16, %cst_8 {dimension_numbers = #tpu.dot_dimension_numbers<[2], [1], [1], [2], [0, 0, 0, 1, 1, 2], [0], [0]>} : vector<1x8x8xf32>, vector<1x8x16xf32>, vector<1x8x16xf32> -> vector<1x8x16xf32>
    "tpu.trace_stop"() : () -> ()
    %18 = arith.addf %7, %17 : vector<1x8x16xf32>
    %19 = vector.extract_strided_slice %3 {offsets = [0, 0, 22], sizes = [1, 8, 16], strides = [1, 1, 1]} : vector<1x8x44xf32> to vector<1x8x16xf32>
    "tpu.trace_start"() <{level = 10 : i32, message = "bpc,bcw->bpw"}> : () -> ()
    %cst_9 = arith.constant dense<0.000000e+00> : vector<1x8x16xf32>
    %20 = tpu.matmul %15, %19, %cst_9 {dimension_numbers = #tpu.dot_dimension_numbers<[2], [1], [1], [2], [0, 0, 0, 1, 1, 2], [0], [0]>} : vector<1x8x8xf32>, vector<1x8x16xf32>, vector<1x8x16xf32> -> vector<1x8x16xf32>
    "tpu.trace_stop"() : () -> ()
    %21 = arith.addf %9, %20 : vector<1x8x16xf32>
    %22 = vector.extract_strided_slice %4 {offsets = [1, 0, 0], sizes = [1, 8, 8], strides = [1, 1, 1]} : vector<14x8x8xf32> to vector<1x8x8xf32>
    %23 = vector.shape_cast %22 : vector<1x8x8xf32> to vector<8x8xf32>
    %24 = vector.shape_cast %23 : vector<8x8xf32> to vector<1x8x8xf32>
    %25 = vector.extract_strided_slice %4 {offsets = [8, 0, 0], sizes = [1, 8, 8], strides = [1, 1, 1]} : vector<14x8x8xf32> to vector<1x8x8xf32>
    %26 = vector.shape_cast %25 : vector<1x8x8xf32> to vector<8x8xf32>
    %27 = vector.shape_cast %26 : vector<8x8xf32> to vector<1x8x8xf32>
    %28 = vector.extract_strided_slice %3 {offsets = [0, 0, 1], sizes = [1, 8, 16], strides = [1, 1, 1]} : vector<1x8x44xf32> to vector<1x8x16xf32>
    "tpu.trace_start"() <{level = 10 : i32, message = "bpc,bch->bph"}> : () -> ()
    %cst_10 = arith.constant dense<0.000000e+00> : vector<1x8x16xf32>
    %29 = tpu.matmul %24, %28, %cst_10 {dimension_numbers = #tpu.dot_dimension_numbers<[2], [1], [1], [2], [0, 0, 0, 1, 1, 2], [0], [0]>} : vector<1x8x8xf32>, vector<1x8x16xf32>, vector<1x8x16xf32> -> vector<1x8x16xf32>
    "tpu.trace_stop"() : () -> ()
    %30 = arith.addf %18, %29 : vector<1x8x16xf32>
    %31 = vector.extract_strided_slice %3 {offsets = [0, 0, 23], sizes = [1, 8, 16], strides = [1, 1, 1]} : vector<1x8x44xf32> to vector<1x8x16xf32>
    "tpu.trace_start"() <{level = 10 : i32, message = "bpc,bcw->bpw"}> : () -> ()
    %cst_11 = arith.constant dense<0.000000e+00> : vector<1x8x16xf32>
    %32 = tpu.matmul %27, %31, %cst_11 {dimension_numbers = #tpu.dot_dimension_numbers<[2], [1], [1], [2], [0, 0, 0, 1, 1, 2], [0], [0]>} : vector<1x8x8xf32>, vector<1x8x16xf32>, vector<1x8x16xf32> -> vector<1x8x16xf32>
    "tpu.trace_stop"() : () -> ()
    %33 = arith.addf %21, %32 : vector<1x8x16xf32>
    %34 = vector.extract_strided_slice %4 {offsets = [2, 0, 0], sizes = [1, 8, 8], strides = [1, 1, 1]} : vector<14x8x8xf32> to vector<1x8x8xf32>
    %35 = vector.shape_cast %34 : vector<1x8x8xf32> to vector<8x8xf32>
    %36 = vector.shape_cast %35 : vector<8x8xf32> to vector<1x8x8xf32>
    %37 = vector.extract_strided_slice %4 {offsets = [9, 0, 0], sizes = [1, 8, 8], strides = [1, 1, 1]} : vector<14x8x8xf32> to vector<1x8x8xf32>
    %38 = vector.shape_cast %37 : vector<1x8x8xf32> to vector<8x8xf32>
    %39 = vector.shape_cast %38 : vector<8x8xf32> to vector<1x8x8xf32>
    %40 = vector.extract_strided_slice %3 {offsets = [0, 0, 2], sizes = [1, 8, 16], strides = [1, 1, 1]} : vector<1x8x44xf32> to vector<1x8x16xf32>
    "tpu.trace_start"() <{level = 10 : i32, message = "bpc,bch->bph"}> : () -> ()
    %cst_12 = arith.constant dense<0.000000e+00> : vector<1x8x16xf32>
    %41 = tpu.matmul %36, %40, %cst_12 {dimension_numbers = #tpu.dot_dimension_numbers<[2], [1], [1], [2], [0, 0, 0, 1, 1, 2], [0], [0]>} : vector<1x8x8xf32>, vector<1x8x16xf32>, vector<1x8x16xf32> -> vector<1x8x16xf32>
    "tpu.trace_stop"() : () -> ()
    %42 = arith.addf %30, %41 : vector<1x8x16xf32>
    %43 = vector.extract_strided_slice %3 {offsets = [0, 0, 24], sizes = [1, 8, 16], strides = [1, 1, 1]} : vector<1x8x44xf32> to vector<1x8x16xf32>
    "tpu.trace_start"() <{level = 10 : i32, message = "bpc,bcw->bpw"}> : () -> ()
    %cst_13 = arith.constant dense<0.000000e+00> : vector<1x8x16xf32>
    %44 = tpu.matmul %39, %43, %cst_13 {dimension_numbers = #tpu.dot_dimension_numbers<[2], [1], [1], [2], [0, 0, 0, 1, 1, 2], [0], [0]>} : vector<1x8x8xf32>, vector<1x8x16xf32>, vector<1x8x16xf32> -> vector<1x8x16xf32>
    "tpu.trace_stop"() : () -> ()
    %45 = arith.addf %33, %44 : vector<1x8x16xf32>
    %46 = vector.extract_strided_slice %4 {offsets = [3, 0, 0], sizes = [1, 8, 8], strides = [1, 1, 1]} : vector<14x8x8xf32> to vector<1x8x8xf32>
    %47 = vector.shape_cast %46 : vector<1x8x8xf32> to vector<8x8xf32>
    %48 = vector.shape_cast %47 : vector<8x8xf32> to vector<1x8x8xf32>
    %49 = vector.extract_strided_slice %4 {offsets = [10, 0, 0], sizes = [1, 8, 8], strides = [1, 1, 1]} : vector<14x8x8xf32> to vector<1x8x8xf32>
    %50 = vector.shape_cast %49 : vector<1x8x8xf32> to vector<8x8xf32>
    %51 = vector.shape_cast %50 : vector<8x8xf32> to vector<1x8x8xf32>
    %52 = vector.extract_strided_slice %3 {offsets = [0, 0, 3], sizes = [1, 8, 16], strides = [1, 1, 1]} : vector<1x8x44xf32> to vector<1x8x16xf32>
    "tpu.trace_start"() <{level = 10 : i32, message = "bpc,bch->bph"}> : () -> ()
    %cst_14 = arith.constant dense<0.000000e+00> : vector<1x8x16xf32>
    %53 = tpu.matmul %48, %52, %cst_14 {dimension_numbers = #tpu.dot_dimension_numbers<[2], [1], [1], [2], [0, 0, 0, 1, 1, 2], [0], [0]>} : vector<1x8x8xf32>, vector<1x8x16xf32>, vector<1x8x16xf32> -> vector<1x8x16xf32>
    "tpu.trace_stop"() : () -> ()
    %54 = arith.addf %42, %53 : vector<1x8x16xf32>
    %55 = vector.extract_strided_slice %3 {offsets = [0, 0, 25], sizes = [1, 8, 16], strides = [1, 1, 1]} : vector<1x8x44xf32> to vector<1x8x16xf32>
    "tpu.trace_start"() <{level = 10 : i32, message = "bpc,bcw->bpw"}> : () -> ()
    %cst_15 = arith.constant dense<0.000000e+00> : vector<1x8x16xf32>
    %56 = tpu.matmul %51, %55, %cst_15 {dimension_numbers = #tpu.dot_dimension_numbers<[2], [1], [1], [2], [0, 0, 0, 1, 1, 2], [0], [0]>} : vector<1x8x8xf32>, vector<1x8x16xf32>, vector<1x8x16xf32> -> vector<1x8x16xf32>
    "tpu.trace_stop"() : () -> ()
    %57 = arith.addf %45, %56 : vector<1x8x16xf32>
    %58 = vector.extract_strided_slice %4 {offsets = [4, 0, 0], sizes = [1, 8, 8], strides = [1, 1, 1]} : vector<14x8x8xf32> to vector<1x8x8xf32>
    %59 = vector.shape_cast %58 : vector<1x8x8xf32> to vector<8x8xf32>
    %60 = vector.shape_cast %59 : vector<8x8xf32> to vector<1x8x8xf32>
    %61 = vector.extract_strided_slice %4 {offsets = [11, 0, 0], sizes = [1, 8, 8], strides = [1, 1, 1]} : vector<14x8x8xf32> to vector<1x8x8xf32>
    %62 = vector.shape_cast %61 : vector<1x8x8xf32> to vector<8x8xf32>
    %63 = vector.shape_cast %62 : vector<8x8xf32> to vector<1x8x8xf32>
    %64 = vector.extract_strided_slice %3 {offsets = [0, 0, 4], sizes = [1, 8, 16], strides = [1, 1, 1]} : vector<1x8x44xf32> to vector<1x8x16xf32>
    "tpu.trace_start"() <{level = 10 : i32, message = "bpc,bch->bph"}> : () -> ()
    %cst_16 = arith.constant dense<0.000000e+00> : vector<1x8x16xf32>
    %65 = tpu.matmul %60, %64, %cst_16 {dimension_numbers = #tpu.dot_dimension_numbers<[2], [1], [1], [2], [0, 0, 0, 1, 1, 2], [0], [0]>} : vector<1x8x8xf32>, vector<1x8x16xf32>, vector<1x8x16xf32> -> vector<1x8x16xf32>
    "tpu.trace_stop"() : () -> ()
    %66 = arith.addf %54, %65 : vector<1x8x16xf32>
    %67 = vector.extract_strided_slice %3 {offsets = [0, 0, 26], sizes = [1, 8, 16], strides = [1, 1, 1]} : vector<1x8x44xf32> to vector<1x8x16xf32>
    "tpu.trace_start"() <{level = 10 : i32, message = "bpc,bcw->bpw"}> : () -> ()
    %cst_17 = arith.constant dense<0.000000e+00> : vector<1x8x16xf32>
    %68 = tpu.matmul %63, %67, %cst_17 {dimension_numbers = #tpu.dot_dimension_numbers<[2], [1], [1], [2], [0, 0, 0, 1, 1, 2], [0], [0]>} : vector<1x8x8xf32>, vector<1x8x16xf32>, vector<1x8x16xf32> -> vector<1x8x16xf32>
    "tpu.trace_stop"() : () -> ()
    %69 = arith.addf %57, %68 : vector<1x8x16xf32>
    %70 = vector.extract_strided_slice %4 {offsets = [5, 0, 0], sizes = [1, 8, 8], strides = [1, 1, 1]} : vector<14x8x8xf32> to vector<1x8x8xf32>
    %71 = vector.shape_cast %70 : vector<1x8x8xf32> to vector<8x8xf32>
    %72 = vector.shape_cast %71 : vector<8x8xf32> to vector<1x8x8xf32>
    %73 = vector.extract_strided_slice %4 {offsets = [12, 0, 0], sizes = [1, 8, 8], strides = [1, 1, 1]} : vector<14x8x8xf32> to vector<1x8x8xf32>
    %74 = vector.shape_cast %73 : vector<1x8x8xf32> to vector<8x8xf32>
    %75 = vector.shape_cast %74 : vector<8x8xf32> to vector<1x8x8xf32>
    %76 = vector.extract_strided_slice %3 {offsets = [0, 0, 5], sizes = [1, 8, 16], strides = [1, 1, 1]} : vector<1x8x44xf32> to vector<1x8x16xf32>
    "tpu.trace_start"() <{level = 10 : i32, message = "bpc,bch->bph"}> : () -> ()
    %cst_18 = arith.constant dense<0.000000e+00> : vector<1x8x16xf32>
    %77 = tpu.matmul %72, %76, %cst_18 {dimension_numbers = #tpu.dot_dimension_numbers<[2], [1], [1], [2], [0, 0, 0, 1, 1, 2], [0], [0]>} : vector<1x8x8xf32>, vector<1x8x16xf32>, vector<1x8x16xf32> -> vector<1x8x16xf32>
    "tpu.trace_stop"() : () -> ()
    %78 = arith.addf %66, %77 : vector<1x8x16xf32>
    %79 = vector.extract_strided_slice %3 {offsets = [0, 0, 27], sizes = [1, 8, 16], strides = [1, 1, 1]} : vector<1x8x44xf32> to vector<1x8x16xf32>
    "tpu.trace_start"() <{level = 10 : i32, message = "bpc,bcw->bpw"}> : () -> ()
    %cst_19 = arith.constant dense<0.000000e+00> : vector<1x8x16xf32>
    %80 = tpu.matmul %75, %79, %cst_19 {dimension_numbers = #tpu.dot_dimension_numbers<[2], [1], [1], [2], [0, 0, 0, 1, 1, 2], [0], [0]>} : vector<1x8x8xf32>, vector<1x8x16xf32>, vector<1x8x16xf32> -> vector<1x8x16xf32>
    "tpu.trace_stop"() : () -> ()
    %81 = arith.addf %69, %80 : vector<1x8x16xf32>
    %82 = vector.extract_strided_slice %4 {offsets = [6, 0, 0], sizes = [1, 8, 8], strides = [1, 1, 1]} : vector<14x8x8xf32> to vector<1x8x8xf32>
    %83 = vector.shape_cast %82 : vector<1x8x8xf32> to vector<8x8xf32>
    %84 = vector.shape_cast %83 : vector<8x8xf32> to vector<1x8x8xf32>
    %85 = vector.extract_strided_slice %4 {offsets = [13, 0, 0], sizes = [1, 8, 8], strides = [1, 1, 1]} : vector<14x8x8xf32> to vector<1x8x8xf32>
    %86 = vector.shape_cast %85 : vector<1x8x8xf32> to vector<8x8xf32>
    %87 = vector.shape_cast %86 : vector<8x8xf32> to vector<1x8x8xf32>
    %88 = vector.extract_strided_slice %3 {offsets = [0, 0, 6], sizes = [1, 8, 16], strides = [1, 1, 1]} : vector<1x8x44xf32> to vector<1x8x16xf32>
    "tpu.trace_start"() <{level = 10 : i32, message = "bpc,bch->bph"}> : () -> ()
    %cst_20 = arith.constant dense<0.000000e+00> : vector<1x8x16xf32>
    %89 = tpu.matmul %84, %88, %cst_20 {dimension_numbers = #tpu.dot_dimension_numbers<[2], [1], [1], [2], [0, 0, 0, 1, 1, 2], [0], [0]>} : vector<1x8x8xf32>, vector<1x8x16xf32>, vector<1x8x16xf32> -> vector<1x8x16xf32>
    "tpu.trace_stop"() : () -> ()
    %90 = arith.addf %78, %89 : vector<1x8x16xf32>
    %91 = vector.extract_strided_slice %3 {offsets = [0, 0, 28], sizes = [1, 8, 16], strides = [1, 1, 1]} : vector<1x8x44xf32> to vector<1x8x16xf32>
    "tpu.trace_start"() <{level = 10 : i32, message = "bpc,bcw->bpw"}> : () -> ()
    %cst_21 = arith.constant dense<0.000000e+00> : vector<1x8x16xf32>
    %92 = tpu.matmul %87, %91, %cst_21 {dimension_numbers = #tpu.dot_dimension_numbers<[2], [1], [1], [2], [0, 0, 0, 1, 1, 2], [0], [0]>} : vector<1x8x8xf32>, vector<1x8x16xf32>, vector<1x8x16xf32> -> vector<1x8x16xf32>
    "tpu.trace_stop"() : () -> ()
    %93 = arith.addf %81, %92 : vector<1x8x16xf32>
    %94 = arith.negf %90 : vector<1x8x16xf32>
    %95 = math.exp %94 : vector<1x8x16xf32>
    %cst_22 = arith.constant 1.000000e+00 : f32
    %96 = vector.broadcast %cst_22 : f32 to vector<1x8x16xf32>
    %97 = arith.addf %96, %95 : vector<1x8x16xf32>
    %98 = arith.divf %96, %97 : vector<1x8x16xf32>
    %99 = vector.shape_cast %98 : vector<1x8x16xf32> to vector<8x16xf32>
    %100 = arith.negf %93 : vector<1x8x16xf32>
    %101 = math.exp %100 : vector<1x8x16xf32>
    %cst_23 = arith.constant 1.000000e+00 : f32
    %102 = vector.broadcast %cst_23 : f32 to vector<1x8x16xf32>
    %103 = arith.addf %102, %101 : vector<1x8x16xf32>
    %104 = arith.divf %102, %103 : vector<1x8x16xf32>
    %105 = vector.shape_cast %104 : vector<1x8x16xf32> to vector<8x16xf32>
    %c0_24 = arith.constant 0 : index
    %c0_25 = arith.constant 0 : index
    %106 = vector.load %arg5[%c0_24, %c0_25] : memref<16x256xf32, #tpu.memory_space<vmem>>, vector<16x256xf32>
    %cst_26 = arith.constant dense<0.000000e+00> : vector<8x256xf32>
    %107 = tpu.matmul %99, %106, %cst_26 {dimension_numbers = #tpu.dot_dimension_numbers<[1], [0], [0], [1], [0, 0, 1, 1], [], []>} : vector<8x16xf32>, vector<16x256xf32>, vector<8x256xf32> -> vector<8x256xf32>
    %c0_27 = arith.constant 0 : index
    %c0_28 = arith.constant 0 : index
    %108 = vector.load %arg6[%c0_27, %c0_28] : memref<16x256xf32, #tpu.memory_space<vmem>>, vector<16x256xf32>
    %cst_29 = arith.constant dense<0.000000e+00> : vector<8x256xf32>
    %109 = tpu.matmul %105, %108, %cst_29 {dimension_numbers = #tpu.dot_dimension_numbers<[1], [0], [0], [1], [0, 0, 1, 1], [], []>} : vector<8x16xf32>, vector<16x256xf32>, vector<8x256xf32> -> vector<8x256xf32>
    %110 = arith.addf %107, %109 : vector<8x256xf32>
    %111 = arith.mulf %0, %110 : vector<8x256xf32>
    %c0_30 = arith.constant 0 : index
    %c0_31 = arith.constant 0 : index
    %112 = vector.load %arg7[%c0_30, %c0_31] : memref<8x256xf32, #tpu.memory_space<vmem>>, vector<8x256xf32>
    tpu.vector_store %arg7[%c0_30, %c0_31], %111 {strides = array<i32>} : memref<8x256xf32, #tpu.memory_space<vmem>>, vector<8x256xf32>,
    return
  }
  func.func @transform_0(%arg0: i32) -> (i32, i32) {
    %c0_i32 = arith.constant 0 : i32
    %c0_i32_0 = arith.constant 0 : i32
    return %arg0, %c0_i32 : i32, i32
  }
  func.func @transform_1(%arg0: i32) -> (i32, i32) {
    %c0_i32 = arith.constant 0 : i32
    %c0_i32_0 = arith.constant 0 : i32
    %c0_i32_1 = arith.constant 0 : i32
    return %c0_i32, %c0_i32_0 : i32, i32
  }
  func.func @transform_2(%arg0: i32) -> (i32, i32, i32) {
    %c0_i32 = arith.constant 0 : i32
    %c0_i32_0 = arith.constant 0 : i32
    %c0_i32_1 = arith.constant 0 : i32
    %c0_i32_2 = arith.constant 0 : i32
    return %c0_i32, %c0_i32_0, %c0_i32_1 : i32, i32, i32
  }
  func.func @transform_3(%arg0: i32) -> (i32, i32) {
    %c0_i32 = arith.constant 0 : i32
    %c0_i32_0 = arith.constant 0 : i32
    %c0_i32_1 = arith.constant 0 : i32
    return %c0_i32, %c0_i32_0 : i32, i32
  }
  func.func @transform_4(%arg0: i32) -> (i32, i32) {
    %c0_i32 = arith.constant 0 : i32
    %c0_i32_0 = arith.constant 0 : i32
    %c0_i32_1 = arith.constant 0 : i32
    return %c0_i32, %c0_i32_0 : i32, i32
  }
  func.func @transform_5(%arg0: i32) -> (i32, i32) {
    %c0_i32 = arith.constant 0 : i32
    %c0_i32_0 = arith.constant 0 : i32
    %c0_i32_1 = arith.constant 0 : i32
    return %c0_i32, %c0_i32_0 : i32, i32
  }
  func.func @transform_6(%arg0: i32) -> (i32, i32) {
    %c0_i32 = arith.constant 0 : i32
    %c0_i32_0 = arith.constant 0 : i32
    return %arg0, %c0_i32 : i32, i32
  }
}

</mosaic_0001>

<llo_original>
// kernel: tpu_custom_call.1
$region0: #{tpu_custom_call.1}
  #allocation0 [shape = 'u32[]', space=smem, size = 0x4, offset = 0x4, fixed_abs, tag = 'smem constant byte address 0x4 - core index']
  #allocation1 [shape = 'u32[144,128]{1,0:T(1,128)}', space=vmem, size = 0x12000, scoped, tag = 'internal scratch']
  %s0 = inlined_call_operand.vmem [shape: f32[16,256], index: 0, kind: input, shape index: {}]
  %s1 = inlined_call_operand.vmem [shape: f32[256,44], index: 1, kind: input, shape index: {}]
  %s2 = inlined_call_operand.vmem [shape: f32[14,8,8], index: 2, kind: input, shape index: {}]
  %s3 = inlined_call_operand.vmem [shape: f32[8,32], index: 3, kind: input, shape index: {}]
  %s4 = inlined_call_operand.vmem [shape: f32[16,256], index: 4, kind: input, shape index: {}]
  %s5 = inlined_call_operand.vmem [shape: f32[16,256], index: 5, kind: input, shape index: {}]
  %s6 = inlined_call_operand.hbm [shape: f32[16,256], index: 6, kind: output, shape index: {}]
  %s7 = sld [smem:[#allocation0]]
  $region57: #{tpu_custom_call.1} parent=0
    _
  %s9 = ssub.s32 1, %s7
  %s10 = scalar_select 0, %s9, %s7
  $region1: #{tpu_custom_call.1} parent=0
    #allocation2 [shape = 'u8[16384]{0}', space=vmem, size = 0x4000, scoped, tag = 'output window, operand 0']
    #allocation3 [shape = 's32[2]{0}', space=sflag, size = 0x8, scoped, tag = 'scoped memory for tpu_custom_call.1']
    %11 = vsyncpa [#allocation3], 0
    %s12 = scalar_lea.sflag [#allocation3], 1
    %13 = vsyncpa %s12, 0
    loop: start=0, step=1, limit=4
    $region2: #{tpu_custom_call.1} parent=1 // loop_pre_header
      _
    $region3: #{tpu_custom_call.1} parent=1 // loop_header
      %s15 = sphi 0, %s19
      %p16 = scmp.ge.s32.totalorder %s15, 4
      %s25 = sphi 0, %s27
      %s28 = sphi 0, %s25
      %s29 = sphi 0, %s28
      %s45 = sphi 0, %s29
      %s49 = sphi 0, %s49
      %s51 = sphi 0, %s49
      %s52 = sphi 0, %s51
      %s66 = sphi 0, %s52
      %s70 = sphi 0, %s70
      %s72 = sphi 0, %s70
      %s73 = sphi 0, %s72
      %s87 = sphi 0, %s73
      %s91 = sphi 0, %s91
      %s93 = sphi 0, %s91
      %s94 = sphi 0, %s93
      %s108 = sphi 0, %s94
      %s112 = sphi 0, %s112
      %s114 = sphi 0, %s112
      %s115 = sphi 0, %s114
      %s129 = sphi 0, %s115
      %s133 = sphi 0, %s133
      %s135 = sphi 0, %s133
      %s136 = sphi 0, %s135
      %s150 = sphi 0, %s136
      %s156 = sphi 0, %s158
      %s159 = sphi 0, %s156
      %s160 = sphi 0, %s159
      %s176 = sphi 0, %s160
    $region4: #{tpu_custom_call.1} parent=1 // loop_header_branch
      %18 = sbr.rel (%p16) target = $region8
    $region5: #{tpu_custom_call.1} parent=1 // loop_body
      %s20 = ssub.s32 %s15, 1
      %s21 = ssub.s32 %s15, 2
      %s22 = sadd.s32 %s15, 1
      %s23 = ssub.s32 %s15, %s22
      %p24 = scmp.eq.s32.totalorder %s23, 0
      %s26 = sadd.s32 %s25, 1
      %s27 = scalar_select %p24, %s25, %s26
      %p30 = pneg %p24
      %p31 = scmp.eq.s32.totalorder %s15, 1
      %p32 = por %p30, %p31
      %p33 = scmp.ne.s32.totalorder %s25, %s28
      %p34 = scmp.eq.s32.totalorder %s15, 0
      %p35 = por %p33, %p34
      %p36 = scmp.ne.s32.totalorder %s25, %s28
      %p37 = scmp.eq.s32.totalorder %s20, 1
      %p38 = por %p36, %p37
      %p39 = scmp.ne.s32.totalorder %s28, %s29
      %p40 = scmp.eq.s32.totalorder %s20, 0
      %p41 = por %p39, %p40
      %p42 = scmp.ne.s32.totalorder %s28, %s29
      %p43 = scmp.eq.s32.totalorder %s21, 1
      %p44 = por %p42, %p43
      %p46 = scmp.ne.s32.totalorder %s29, %s45
      %p47 = scmp.eq.s32.totalorder %s21, 0
      %p48 = por %p46, %p47
      %s50 = sadd.s32 %s49, 1
      %p53 = scmp.eq.s32.totalorder %s15, 1
      %p54 = scmp.ne.s32.totalorder %s49, %s51
      %p55 = scmp.eq.s32.totalorder %s15, 0
      %p56 = por %p54, %p55
      %p57 = scmp.ne.s32.totalorder %s49, %s51
      %p58 = scmp.eq.s32.totalorder %s20, 1
      %p59 = por %p57, %p58
      %p60 = scmp.ne.s32.totalorder %s51, %s52
      %p61 = scmp.eq.s32.totalorder %s20, 0
      %p62 = por %p60, %p61
      %p63 = scmp.ne.s32.totalorder %s51, %s52
      %p64 = scmp.eq.s32.totalorder %s21, 1
      %p65 = por %p63, %p64
      %p67 = scmp.ne.s32.totalorder %s52, %s66
      %p68 = scmp.eq.s32.totalorder %s21, 0
      %p69 = por %p67, %p68
      %s71 = sadd.s32 %s70, 1
      %p74 = scmp.eq.s32.totalorder %s15, 1
      %p75 = scmp.ne.s32.totalorder %s70, %s72
      %p76 = scmp.eq.s32.totalorder %s15, 0
      %p77 = por %p75, %p76
      %p78 = scmp.ne.s32.totalorder %s70, %s72
      %p79 = scmp.eq.s32.totalorder %s20, 1
      %p80 = por %p78, %p79
      %p81 = scmp.ne.s32.totalorder %s72, %s73
      %p82 = scmp.eq.s32.totalorder %s20, 0
      %p83 = por %p81, %p82
      %p84 = scmp.ne.s32.totalorder %s72, %s73
      %p85 = scmp.eq.s32.totalorder %s21, 1
      %p86 = por %p84, %p85
      %p88 = scmp.ne.s32.totalorder %s73, %s87
      %p89 = scmp.eq.s32.totalorder %s21, 0
      %p90 = por %p88, %p89
      %s92 = sadd.s32 %s91, 1
      %p95 = scmp.eq.s32.totalorder %s15, 1
      %p96 = scmp.ne.s32.totalorder %s91, %s93
      %p97 = scmp.eq.s32.totalorder %s15, 0
      %p98 = por %p96, %p97
      %p99 = scmp.ne.s32.totalorder %s91, %s93
      %p100 = scmp.eq.s32.totalorder %s20, 1
      %p101 = por %p99, %p100
      %p102 = scmp.ne.s32.totalorder %s93, %s94
      %p103 = scmp.eq.s32.totalorder %s20, 0
      %p104 = por %p102, %p103
      %p105 = scmp.ne.s32.totalorder %s93, %s94
      %p106 = scmp.eq.s32.totalorder %s21, 1
      %p107 = por %p105, %p106
      %p109 = scmp.ne.s32.totalorder %s94, %s108
      %p110 = scmp.eq.s32.totalorder %s21, 0
      %p111 = por %p109, %p110
      %s113 = sadd.s32 %s112, 1
      %p116 = scmp.eq.s32.totalorder %s15, 1
      %p117 = scmp.ne.s32.totalorder %s112, %s114
      %p118 = scmp.eq.s32.totalorder %s15, 0
      %p119 = por %p117, %p118
      %p120 = scmp.ne.s32.totalorder %s112, %s114
      %p121 = scmp.eq.s32.totalorder %s20, 1
      %p122 = por %p120, %p121
      %p123 = scmp.ne.s32.totalorder %s114, %s115
      %p124 = scmp.eq.s32.totalorder %s20, 0
      %p125 = por %p123, %p124
      %p126 = scmp.ne.s32.totalorder %s114, %s115
      %p127 = scmp.eq.s32.totalorder %s21, 1
      %p128 = por %p126, %p127
      %p130 = scmp.ne.s32.totalorder %s115, %s129
      %p131 = scmp.eq.s32.totalorder %s21, 0
      %p132 = por %p130, %p131
      %s134 = sadd.s32 %s133, 1
      %p137 = scmp.eq.s32.totalorder %s15, 1
      %p138 = scmp.ne.s32.totalorder %s133, %s135
      %p139 = scmp.eq.s32.totalorder %s15, 0
      %p140 = por %p138, %p139
      %p141 = scmp.ne.s32.totalorder %s133, %s135
      %p142 = scmp.eq.s32.totalorder %s20, 1
      %p143 = por %p141, %p142
      %p144 = scmp.ne.s32.totalorder %s135, %s136
      %p145 = scmp.eq.s32.totalorder %s20, 0
      %p146 = por %p144, %p145
      %p147 = scmp.ne.s32.totalorder %s135, %s136
      %p148 = scmp.eq.s32.totalorder %s21, 1
      %p149 = por %p147, %p148
      %p151 = scmp.ne.s32.totalorder %s136, %s150
      %p152 = scmp.eq.s32.totalorder %s21, 0
      %p153 = por %p151, %p152
      %s154 = ssub.s32 %s15, %s22
      %p155 = scmp.eq.s32.totalorder %s154, 0
      %s157 = sadd.s32 %s156, 1
      %s158 = scalar_select %p155, %s156, %s157
      %p161 = pneg %p155
      %p162 = scmp.eq.s32.totalorder %s15, 1
      %p163 = por %p161, %p162
      %p164 = scmp.ne.s32.totalorder %s156, %s159
      %p165 = scmp.eq.s32.totalorder %s15, 0
      %p166 = por %p164, %p165
      %p167 = scmp.ne.s32.totalorder %s156, %s159
      %p168 = scmp.eq.s32.totalorder %s20, 1
      %p169 = por %p167, %p168
      %p170 = scmp.ne.s32.totalorder %s159, %s160
      %p171 = scmp.eq.s32.totalorder %s20, 0
      %p172 = por %p170, %p171
      %p173 = scmp.ne.s32.totalorder %s159, %s160
      %p174 = scmp.eq.s32.totalorder %s21, 1
      %p175 = por %p173, %p174
      %p177 = scmp.ne.s32.totalorder %s160, %s176
      %p178 = scmp.eq.s32.totalorder %s21, 0
      %p179 = por %p177, %p178
      %p180 = scmp.le.s32.totalorder 1, %s15
      %p181 = scmp.lt.s32.totalorder %s15, 3
      %p182 = pnand %p180, %p181
      %p183 = pneg %p182
      // Predicated region
      $region9: #{tpu_custom_call.1} parent=5 // pred_check
        _
      $region10: #{tpu_custom_call.1} parent=5 // pred_check_branch
        %185 = sbr.rel (%p182) target = $region12
      $region11: #{tpu_custom_call.1} parent=5 // pred_region
        %s186 = ssub.s32 %s15, 1
        // Predicated region
        $region13: #{tpu_custom_call.1} parent=11 // pred_check
          %p187 = pneg %p62
        $region14: #{tpu_custom_call.1} parent=11 // pred_check_branch
          %189 = sbr.rel (%p187) target = $region16
        $region15: #{tpu_custom_call.1} parent=11 // pred_region
          _
        $region16: #{tpu_custom_call.1} parent=11 // pred_fallthru
          _
        // Predicated region
        $region17: #{tpu_custom_call.1} parent=11 // pred_check
          %p190 = pneg %p83
        $region18: #{tpu_custom_call.1} parent=11 // pred_check_branch
          %192 = sbr.rel (%p190) target = $region20
        $region19: #{tpu_custom_call.1} parent=11 // pred_region
          _
        $region20: #{tpu_custom_call.1} parent=11 // pred_fallthru
          _
        // Predicated region
        $region21: #{tpu_custom_call.1} parent=11 // pred_check
          %p193 = pneg %p104
        $region22: #{tpu_custom_call.1} parent=11 // pred_check_branch
          %195 = sbr.rel (%p193) target = $region24
        $region23: #{tpu_custom_call.1} parent=11 // pred_region
          _
        $region24: #{tpu_custom_call.1} parent=11 // pred_fallthru
          _
        // Predicated region
        $region25: #{tpu_custom_call.1} parent=11 // pred_check
          %p196 = pneg %p125
        $region26: #{tpu_custom_call.1} parent=11 // pred_check_branch
          %198 = sbr.rel (%p196) target = $region28
        $region27: #{tpu_custom_call.1} parent=11 // pred_region
          _
        $region28: #{tpu_custom_call.1} parent=11 // pred_fallthru
          _
        // Predicated region
        $region29: #{tpu_custom_call.1} parent=11 // pred_check
          %p199 = pneg %p146
        $region30: #{tpu_custom_call.1} parent=11 // pred_check_branch
          %201 = sbr.rel (%p199) target = $region32
        $region31: #{tpu_custom_call.1} parent=11 // pred_region
          _
        $region32: #{tpu_custom_call.1} parent=11 // pred_fallthru
          _
      $region12: #{tpu_custom_call.1} parent=5 // pred_fallthru
        _
      %p202 = scmp.lt.s32.totalorder %s15, 2
      // Predicated region
      $region33: #{tpu_custom_call.1} parent=5 // pred_check
        %p203 = pneg %p202
      $region34: #{tpu_custom_call.1} parent=5 // pred_check_branch
        %205 = sbr.rel (%p203) target = $region36
      $region35: #{tpu_custom_call.1} parent=5 // pred_region
        // Predicated region
        $region37: #{tpu_custom_call.1} parent=35 // pred_check
          %p206 = pneg %p35
        $region38: #{tpu_custom_call.1} parent=35 // pred_check_branch
          %208 = sbr.rel (%p206) target = $region40
        $region39: #{tpu_custom_call.1} parent=35 // pred_region
          %p209 = scmp.lt.s32.totalorder %s15, 1
          %s210 = scalar_select %p209, %s15, 1
          %s211 = smul.addr %s210, 2
          %s212 = smul.addr %s211, 8
          %s213 = scalar_lea.vmem %s0, %s212
        $region40: #{tpu_custom_call.1} parent=35 // pred_fallthru
          _
      $region36: #{tpu_custom_call.1} parent=5 // pred_fallthru
        _
      %p214 = scmp.le.s32.totalorder 1, %s15
      %p215 = scmp.lt.s32.totalorder %s15, 3
      %p216 = pnand %p214, %p215
      %p217 = pneg %p216
      // Predicated region
      $region41: #{tpu_custom_call.1} parent=5 // pred_check
        _
      $region42: #{tpu_custom_call.1} parent=5 // pred_check_branch
        %219 = sbr.rel (%p216) target = $region44
      $region43: #{tpu_custom_call.1} parent=5 // pred_region
        %s220 = ssub.s32 %s15, 1
        %p221 = scmp.lt.s32.totalorder %s20, 1
        %s222 = scalar_select %p221, %s20, 1
        %s223 = smul.addr %s222, 2
        %s224 = smul.addr %s223, 8
        %s225 = scalar_lea.vmem %s0, %s224
        %p226 = pneg %p41
        %p227 = pneg %p38
        %p228 = pneg %p62
        %p229 = pneg %p59
        %p230 = pneg %p83
        %p231 = pneg %p80
        %p232 = pneg %p104
        %p233 = pneg %p101
        %p234 = pneg %p125
        %p235 = pneg %p122
        %p236 = pneg %p146
        %p237 = pneg %p143
        %p238 = pneg %p172
        %p239 = pneg %p169
        %s240 = sand.u32 %s159, 1
        %s241 = scalar_lea.sflag [#allocation3], %s240
        %s242 = sand.u32 %s159, 1
        %s243 = smul.addr %s242, 16
        %s244 = scalar_lea.vmem [#allocation2], %s243
        %p245 = scmp.lt.s32.totalorder %s20, 1
        %s246 = scalar_select %p245, %s20, 1
        %s247 = smul.addr %s246, 2
        %s248 = smul.addr %s247, 8
        %s249 = scalar_lea.vmem %s0, %s248
        %v250 = vld [vmem:[%s249] sm:$0xff]
        %v251 = vld [vmem:[%s249 + $0x8] sm:$0xff]
        %v252 = vld [vmem:[%s1] sm:$0xff]
        %v253 = vld [vmem:[%s1 + $0x8] sm:$0xff]
        %v254 = vld [vmem:[%s1 + $0x10] sm:$0xff]
        %v255 = vld [vmem:[%s1 + $0x18] sm:$0xff]
        %v256 = vld [vmem:[%s1 + $0x20] sm:$0xff]
        %v257 = vld [vmem:[%s1 + $0x28] sm:$0xff]
        %v258 = vld [vmem:[%s1 + $0x30] sm:$0xff]
        %v259 = vld [vmem:[%s1 + $0x38] sm:$0xff]
        %v260 = vld [vmem:[%s1 + $0x40] sm:$0xff]
        %v261 = vld [vmem:[%s1 + $0x48] sm:$0xff]
        %v262 = vld [vmem:[%s1 + $0x50] sm:$0xff]
        %v263 = vld [vmem:[%s1 + $0x58] sm:$0xff]
        %v264 = vld [vmem:[%s1 + $0x60] sm:$0xff]
        %v265 = vld [vmem:[%s1 + $0x68] sm:$0xff]
        %v266 = vld [vmem:[%s1 + $0x70] sm:$0xff]
        %v267 = vld [vmem:[%s1 + $0x78] sm:$0xff]
        %v268 = vld [vmem:[%s1 + $0x80] sm:$0xff]
        %v269 = vld [vmem:[%s1 + $0x88] sm:$0xff]
        %v270 = vld [vmem:[%s1 + $0x90] sm:$0xff]
        %v271 = vld [vmem:[%s1 + $0x98] sm:$0xff]
        %v272 = vld [vmem:[%s1 + $0xa0] sm:$0xff]
        %v273 = vld [vmem:[%s1 + $0xa8] sm:$0xff]
        %v274 = vld [vmem:[%s1 + $0xb0] sm:$0xff]
        %v275 = vld [vmem:[%s1 + $0xb8] sm:$0xff]
        %v276 = vld [vmem:[%s1 + $0xc0] sm:$0xff]
        %v277 = vld [vmem:[%s1 + $0xc8] sm:$0xff]
        %v278 = vld [vmem:[%s1 + $0xd0] sm:$0xff]
        %v279 = vld [vmem:[%s1 + $0xd8] sm:$0xff]
        %v280 = vld [vmem:[%s1 + $0xe0] sm:$0xff]
        %v281 = vld [vmem:[%s1 + $0xe8] sm:$0xff]
        %v282 = vld [vmem:[%s1 + $0xf0] sm:$0xff]
        %v283 = vld [vmem:[%s1 + $0xf8] sm:$0xff]
        %284 = vmatprep.subr.mxu0 0.0
        %285 = vmatpush1.msra.mxu0 %v267
        %286 = vmatprep.subr.mxu0 0.0
        %287 = vmatpush1.msra.mxu0 %v266
        %288 = vmatprep.subr.mxu0 0.0
        %289 = vmatpush1.msra.mxu0 %v265
        %290 = vmatprep.subr.mxu0 0.0
        %291 = vmatpush1.msra.mxu0 %v264
        %292 = vmatprep.subr.mxu0 0.0
        %293 = vmatpush1.msra.mxu0 %v263
        %294 = vmatprep.subr.mxu0 0.0
        %295 = vmatpush1.msra.mxu0 %v262
        %296 = vmatprep.subr.mxu0 0.0
        %297 = vmatpush1.msra.mxu0 %v261
        %298 = vmatprep.subr.mxu0 0.0
        %299 = vmatpush1.msra.mxu0 %v260
        %300 = vmatprep.subr.mxu0 0.0
        %301 = vmatpush1.msra.mxu0 %v259
        %302 = vmatprep.subr.mxu0 0.0
        %303 = vmatpush1.msra.mxu0 %v258
        %304 = vmatprep.subr.mxu0 0.0
        %305 = vmatpush1.msra.mxu0 %v257
        %306 = vmatprep.subr.mxu0 0.0
        %307 = vmatpush1.msra.mxu0 %v256
        %308 = vmatprep.subr.mxu0 0.0
        %309 = vmatpush1.msra.mxu0 %v255
        %310 = vmatprep.subr.mxu0 0.0
        %311 = vmatpush1.msra.mxu0 %v254
        %312 = vmatprep.subr.mxu0 0.0
        %313 = vmatpush1.msra.mxu0 %v253
        %314 = vmatprep.subr.mxu0 0.0
        %315 = vmatpush1.msra.mxu0 %v252
        %316 = vmatprep.subr.mxu0 0.0
        %317 = vmatpush2.msra.mxu0 %v283
        %318 = vmatprep.subr.mxu0 0.0
        %319 = vmatpush2.msra.mxu0 %v282
        %320 = vmatprep.subr.mxu0 0.0
        %321 = vmatpush2.msra.mxu0 %v281
        %322 = vmatprep.subr.mxu0 0.0
        %323 = vmatpush2.msra.mxu0 %v280
        %324 = vmatprep.subr.mxu0 0.0
        %325 = vmatpush2.msra.mxu0 %v279
        %326 = vmatprep.subr.mxu0 0.0
        %327 = vmatpush2.msra.mxu0 %v278
        %328 = vmatprep.subr.mxu0 0.0
        %329 = vmatpush2.msra.mxu0 %v277
        %330 = vmatprep.subr.mxu0 0.0
        %331 = vmatpush2.msra.mxu0 %v276
        %332 = vmatprep.subr.mxu0 0.0
        %333 = vmatpush2.msra.mxu0 %v275
        %334 = vmatprep.subr.mxu0 0.0
        %335 = vmatpush2.msra.mxu0 %v274
        %336 = vmatprep.subr.mxu0 0.0
        %337 = vmatpush2.msra.mxu0 %v273
        %338 = vmatprep.subr.mxu0 0.0
        %339 = vmatpush2.msra.mxu0 %v272
        %340 = vmatprep.subr.mxu0 0.0
        %341 = vmatpush2.msra.mxu0 %v271
        %342 = vmatprep.subr.mxu0 0.0
        %343 = vmatpush2.msra.mxu0 %v270
        %344 = vmatprep.subr.mxu0 0.0
        %345 = vmatpush2.msra.mxu0 %v269
        %346 = vmatprep.subr.mxu0 0.0
        %347 = vmatpush2.msra.mxu0 %v268
        %348 = vmatprep.mubr.f32.mxu0 %v251
        %349 = vmatmul.mubr.f32.gmra.mxu0 %v250
        %v350 = vpop.f32.mrf.mxu0
        %v351 = vadd.f32 0.0, %v350
        %v352 = vpop.f32.mrf.mxu0
        %353 = vdwg.mxu0
        %v354 = vld [vmem:[%s2] sm:$0xff]
        %v355 = vld [vmem:[%s2 + $0x8] sm:$0xff]
        %v356 = vld [vmem:[%s2 + $0x10] sm:$0xff]
        %v357 = vld [vmem:[%s2 + $0x18] sm:$0xff]
        %v358 = vld [vmem:[%s2 + $0x20] sm:$0xff]
        %v359 = vld [vmem:[%s2 + $0x28] sm:$0xff]
        %v360 = vld [vmem:[%s2 + $0x30] sm:$0xff]
        %v361 = vld [vmem:[%s2 + $0x38] sm:$0xff]
        %v362 = vld [vmem:[%s2 + $0x40] sm:$0xff]
        %v363 = vld [vmem:[%s2 + $0x48] sm:$0xff]
        %v364 = vld [vmem:[%s2 + $0x50] sm:$0xff]
        %v365 = vld [vmem:[%s2 + $0x58] sm:$0xff]
        %v366 = vld [vmem:[%s2 + $0x60] sm:$0xff]
        %v367 = vld [vmem:[%s2 + $0x68] sm:$0xff]
        %v368 = vld [vmem:[%s3] sm:$0xff]
        %vm369 = vcmask 64512
        %v371 = vsel %vm369, %v354, 0
        %373 = vmatprep.subr.mxu0 0.0
        %374 = vmatpush1.msra.mxu0 0.0
        %375 = vmatprep.subr.mxu0 0.0
        %376 = vmatpush1.msra.mxu0 0.0
        %377 = vmatprep.subr.mxu0 0.0
        %378 = vmatpush1.msra.mxu0 0.0
        %379 = vmatprep.subr.mxu0 0.0
        %380 = vmatpush1.msra.mxu0 0.0
        %381 = vmatprep.subr.mxu0 0.0
        %382 = vmatpush1.msra.mxu0 0.0
        %383 = vmatprep.subr.mxu0 0.0
        %384 = vmatpush1.msra.mxu0 0.0
        %385 = vmatprep.subr.mxu0 0.0
        %386 = vmatpush1.msra.mxu0 0.0
        %387 = vmatprep.subr.mxu0 0.0
        %388 = vmatpush1.msra.mxu0 0.0
        %389 = vmatprep.subr.mxu0 0.0
        %390 = vmatpush1.msra.mxu0 0.0
        %391 = vmatprep.subr.mxu0 0.0
        %392 = vmatpush1.msra.mxu0 0.0
        %393 = vmatprep.subr.mxu0 0.0
        %394 = vmatpush1.msra.mxu0 0.0
        %395 = vmatprep.subr.mxu0 0.0
        %396 = vmatpush1.msra.mxu0 0.0
        %397 = vmatprep.subr.mxu0 0.0
        %398 = vmatpush1.msra.mxu0 0.0
        %399 = vmatprep.subr.mxu0 0.0
        %400 = vmatpush1.msra.mxu0 0.0
        %401 = vmatprep.subr.mxu0 0.0
        %402 = vmatpush1.msra.mxu0 0.0
        %403 = vmatprep.subr.mxu0 0.0
        %404 = vmatpush1.msra.mxu0 %v351
        %405 = vmatprep.subr.mxu0 0.0
        %406 = vmatpush2.msra.mxu0 0.0
        %407 = vmatprep.subr.mxu0 0.0
        %408 = vmatpush2.msra.mxu0 0.0
        %409 = vmatprep.subr.mxu0 0.0
        %410 = vmatpush2.msra.mxu0 0.0
        %411 = vmatprep.subr.mxu0 0.0
        %412 = vmatpush2.msra.mxu0 0.0
        %413 = vmatprep.subr.mxu0 0.0
        %414 = vmatpush2.msra.mxu0 0.0
        %415 = vmatprep.subr.mxu0 0.0
        %416 = vmatpush2.msra.mxu0 0.0
        %417 = vmatprep.subr.mxu0 0.0
        %418 = vmatpush2.msra.mxu0 0.0
        %419 = vmatprep.subr.mxu0 0.0
        %420 = vmatpush2.msra.mxu0 0.0
        %421 = vmatprep.subr.mxu0 0.0
        %422 = vmatpush2.msra.mxu0 0.0
        %423 = vmatprep.subr.mxu0 0.0
        %424 = vmatpush2.msra.mxu0 0.0
        %425 = vmatprep.subr.mxu0 0.0
        %426 = vmatpush2.msra.mxu0 0.0
        %427 = vmatprep.subr.mxu0 0.0
        %428 = vmatpush2.msra.mxu0 0.0
        %429 = vmatprep.subr.mxu0 0.0
        %430 = vmatpush2.msra.mxu0 0.0
        %431 = vmatprep.subr.mxu0 0.0
        %432 = vmatpush2.msra.mxu0 0.0
        %433 = vmatprep.subr.mxu0 0.0
        %434 = vmatpush2.msra.mxu0 0.0
        %435 = vmatprep.subr.mxu0 0.0
        %436 = vmatpush2.msra.mxu0 0.0
        %437 = vmatprep.mubr.f32.mxu0 0.0
        %438 = vmatmul.mubr.f32.gmra.mxu0 %v371
        %v439 = vpop.f32.mrf.mxu0
        %v440 = vadd.f32 0.0, %v439
        %v441 = vpop.f32.mrf.mxu0
        %442 = vdwg.mxu0
        %v443 = vadd.f32 %v368, %v440
        %445 = vrot.lane.b32.xlu0 %v351, 106
        %v446 = vpop.permute.xlu0 %445
        %v449 = vsel %vm369, %v361, 0
        %451 = vmatprep.subr.mxu0 0.0
        %452 = vmatpush1.msra.mxu0 0.0
        %453 = vmatprep.subr.mxu0 0.0
        %454 = vmatpush1.msra.mxu0 0.0
        %455 = vmatprep.subr.mxu0 0.0
        %456 = vmatpush1.msra.mxu0 0.0
        %457 = vmatprep.subr.mxu0 0.0
        %458 = vmatpush1.msra.mxu0 0.0
        %459 = vmatprep.subr.mxu0 0.0
        %460 = vmatpush1.msra.mxu0 0.0
        %461 = vmatprep.subr.mxu0 0.0
        %462 = vmatpush1.msra.mxu0 0.0
        %463 = vmatprep.subr.mxu0 0.0
        %464 = vmatpush1.msra.mxu0 0.0
        %465 = vmatprep.subr.mxu0 0.0
        %466 = vmatpush1.msra.mxu0 0.0
        %467 = vmatprep.subr.mxu0 0.0
        %468 = vmatpush1.msra.mxu0 0.0
        %469 = vmatprep.subr.mxu0 0.0
        %470 = vmatpush1.msra.mxu0 0.0
        %471 = vmatprep.subr.mxu0 0.0
        %472 = vmatpush1.msra.mxu0 0.0
        %473 = vmatprep.subr.mxu0 0.0
        %474 = vmatpush1.msra.mxu0 0.0
        %475 = vmatprep.subr.mxu0 0.0
        %476 = vmatpush1.msra.mxu0 0.0
        %477 = vmatprep.subr.mxu0 0.0
        %478 = vmatpush1.msra.mxu0 0.0
        %479 = vmatprep.subr.mxu0 0.0
        %480 = vmatpush1.msra.mxu0 0.0
        %481 = vmatprep.subr.mxu0 0.0
        %482 = vmatpush1.msra.mxu0 %v446
        %483 = vmatprep.subr.mxu0 0.0
        %484 = vmatpush2.msra.mxu0 0.0
        %485 = vmatprep.subr.mxu0 0.0
        %486 = vmatpush2.msra.mxu0 0.0
        %487 = vmatprep.subr.mxu0 0.0
        %488 = vmatpush2.msra.mxu0 0.0
        %489 = vmatprep.subr.mxu0 0.0
        %490 = vmatpush2.msra.mxu0 0.0
        %491 = vmatprep.subr.mxu0 0.0
        %492 = vmatpush2.msra.mxu0 0.0
        %493 = vmatprep.subr.mxu0 0.0
        %494 = vmatpush2.msra.mxu0 0.0
        %495 = vmatprep.subr.mxu0 0.0
        %496 = vmatpush2.msra.mxu0 0.0
        %497 = vmatprep.subr.mxu0 0.0
        %498 = vmatpush2.msra.mxu0 0.0
        %499 = vmatprep.subr.mxu0 0.0
        %500 = vmatpush2.msra.mxu0 0.0
        %501 = vmatprep.subr.mxu0 0.0
        %502 = vmatpush2.msra.mxu0 0.0
        %503 = vmatprep.subr.mxu0 0.0
        %504 = vmatpush2.msra.mxu0 0.0
        %505 = vmatprep.subr.mxu0 0.0
        %506 = vmatpush2.msra.mxu0 0.0
        %507 = vmatprep.subr.mxu0 0.0
        %508 = vmatpush2.msra.mxu0 0.0
        %509 = vmatprep.subr.mxu0 0.0
        %510 = vmatpush2.msra.mxu0 0.0
        %511 = vmatprep.subr.mxu0 0.0
        %512 = vmatpush2.msra.mxu0 0.0
        %513 = vmatprep.subr.mxu0 0.0
        %514 = vmatpush2.msra.mxu0 0.0
        %515 = vmatprep.mubr.f32.mxu0 0.0
        %516 = vmatmul.mubr.f32.gmra.mxu0 %v449
        %v517 = vpop.f32.mrf.mxu0
        %v518 = vadd.f32 0.0, %v517
        %v519 = vpop.f32.mrf.mxu0
        %520 = vdwg.mxu0
        %522 = vrot.lane.b32.xlu0 %v518, 16
        %v523 = vpop.permute.xlu0 %522
        %v525 = vadd.f32 %v368, %v523
        %526 = vrot.lane.b32.xlu0 %v351, 127
        %v527 = vpop.permute.xlu0 %526
        %v530 = vsel %vm369, %v355, 0
        %532 = vmatprep.subr.mxu0 0.0
        %533 = vmatpush1.msra.mxu0 0.0
        %534 = vmatprep.subr.mxu0 0.0
        %535 = vmatpush1.msra.mxu0 0.0
        %536 = vmatprep.subr.mxu0 0.0
        %537 = vmatpush1.msra.mxu0 0.0
        %538 = vmatprep.subr.mxu0 0.0
        %539 = vmatpush1.msra.mxu0 0.0
        %540 = vmatprep.subr.mxu0 0.0
        %541 = vmatpush1.msra.mxu0 0.0
        %542 = vmatprep.subr.mxu0 0.0
        %543 = vmatpush1.msra.mxu0 0.0
        %544 = vmatprep.subr.mxu0 0.0
        %545 = vmatpush1.msra.mxu0 0.0
        %546 = vmatprep.subr.mxu0 0.0
        %547 = vmatpush1.msra.mxu0 0.0
        %548 = vmatprep.subr.mxu0 0.0
        %549 = vmatpush1.msra.mxu0 0.0
        %550 = vmatprep.subr.mxu0 0.0
        %551 = vmatpush1.msra.mxu0 0.0
        %552 = vmatprep.subr.mxu0 0.0
        %553 = vmatpush1.msra.mxu0 0.0
        %554 = vmatprep.subr.mxu0 0.0
        %555 = vmatpush1.msra.mxu0 0.0
        %556 = vmatprep.subr.mxu0 0.0
        %557 = vmatpush1.msra.mxu0 0.0
        %558 = vmatprep.subr.mxu0 0.0
        %559 = vmatpush1.msra.mxu0 0.0
        %560 = vmatprep.subr.mxu0 0.0
        %561 = vmatpush1.msra.mxu0 0.0
        %562 = vmatprep.subr.mxu0 0.0
        %563 = vmatpush1.msra.mxu0 %v527
        %564 = vmatprep.subr.mxu0 0.0
        %565 = vmatpush2.msra.mxu0 0.0
        %566 = vmatprep.subr.mxu0 0.0
        %567 = vmatpush2.msra.mxu0 0.0
        %568 = vmatprep.subr.mxu0 0.0
        %569 = vmatpush2.msra.mxu0 0.0
        %570 = vmatprep.subr.mxu0 0.0
        %571 = vmatpush2.msra.mxu0 0.0
        %572 = vmatprep.subr.mxu0 0.0
        %573 = vmatpush2.msra.mxu0 0.0
        %574 = vmatprep.subr.mxu0 0.0
        %575 = vmatpush2.msra.mxu0 0.0
        %576 = vmatprep.subr.mxu0 0.0
        %577 = vmatpush2.msra.mxu0 0.0
        %578 = vmatprep.subr.mxu0 0.0
        %579 = vmatpush2.msra.mxu0 0.0
        %580 = vmatprep.subr.mxu0 0.0
        %581 = vmatpush2.msra.mxu0 0.0
        %582 = vmatprep.subr.mxu0 0.0
        %583 = vmatpush2.msra.mxu0 0.0
        %584 = vmatprep.subr.mxu0 0.0
        %585 = vmatpush2.msra.mxu0 0.0
        %586 = vmatprep.subr.mxu0 0.0
        %587 = vmatpush2.msra.mxu0 0.0
        %588 = vmatprep.subr.mxu0 0.0
        %589 = vmatpush2.msra.mxu0 0.0
        %590 = vmatprep.subr.mxu0 0.0
        %591 = vmatpush2.msra.mxu0 0.0
        %592 = vmatprep.subr.mxu0 0.0
        %593 = vmatpush2.msra.mxu0 0.0
        %594 = vmatprep.subr.mxu0 0.0
        %595 = vmatpush2.msra.mxu0 0.0
        %596 = vmatprep.mubr.f32.mxu0 0.0
        %597 = vmatmul.mubr.f32.gmra.mxu0 %v530
        %v598 = vpop.f32.mrf.mxu0
        %v599 = vadd.f32 0.0, %v598
        %v600 = vpop.f32.mrf.mxu0
        %601 = vdwg.mxu0
        %v602 = vadd.f32 %v443, %v599
        %603 = vrot.lane.b32.xlu0 %v351, 105
        %v604 = vpop.permute.xlu0 %603
        %v607 = vsel %vm369, %v362, 0
        %609 = vmatprep.subr.mxu0 0.0
        %610 = vmatpush1.msra.mxu0 0.0
        %611 = vmatprep.subr.mxu0 0.0
        %612 = vmatpush1.msra.mxu0 0.0
        %613 = vmatprep.subr.mxu0 0.0
        %614 = vmatpush1.msra.mxu0 0.0
        %615 = vmatprep.subr.mxu0 0.0
        %616 = vmatpush1.msra.mxu0 0.0
        %617 = vmatprep.subr.mxu0 0.0
        %618 = vmatpush1.msra.mxu0 0.0
        %619 = vmatprep.subr.mxu0 0.0
        %620 = vmatpush1.msra.mxu0 0.0
        %621 = vmatprep.subr.mxu0 0.0
        %622 = vmatpush1.msra.mxu0 0.0
        %623 = vmatprep.subr.mxu0 0.0
        %624 = vmatpush1.msra.mxu0 0.0
        %625 = vmatprep.subr.mxu0 0.0
        %626 = vmatpush1.msra.mxu0 0.0
        %627 = vmatprep.subr.mxu0 0.0
        %628 = vmatpush1.msra.mxu0 0.0
        %629 = vmatprep.subr.mxu0 0.0
        %630 = vmatpush1.msra.mxu0 0.0
        %631 = vmatprep.subr.mxu0 0.0
        %632 = vmatpush1.msra.mxu0 0.0
        %633 = vmatprep.subr.mxu0 0.0
        %634 = vmatpush1.msra.mxu0 0.0
        %635 = vmatprep.subr.mxu0 0.0
        %636 = vmatpush1.msra.mxu0 0.0
        %637 = vmatprep.subr.mxu0 0.0
        %638 = vmatpush1.msra.mxu0 0.0
        %639 = vmatprep.subr.mxu0 0.0
        %640 = vmatpush1.msra.mxu0 %v604
        %641 = vmatprep.subr.mxu0 0.0
        %642 = vmatpush2.msra.mxu0 0.0
        %643 = vmatprep.subr.mxu0 0.0
        %644 = vmatpush2.msra.mxu0 0.0
        %645 = vmatprep.subr.mxu0 0.0
        %646 = vmatpush2.msra.mxu0 0.0
        %647 = vmatprep.subr.mxu0 0.0
        %648 = vmatpush2.msra.mxu0 0.0
        %649 = vmatprep.subr.mxu0 0.0
        %650 = vmatpush2.msra.mxu0 0.0
        %651 = vmatprep.subr.mxu0 0.0
        %652 = vmatpush2.msra.mxu0 0.0
        %653 = vmatprep.subr.mxu0 0.0
        %654 = vmatpush2.msra.mxu0 0.0
        %655 = vmatprep.subr.mxu0 0.0
        %656 = vmatpush2.msra.mxu0 0.0
        %657 = vmatprep.subr.mxu0 0.0
        %658 = vmatpush2.msra.mxu0 0.0
        %659 = vmatprep.subr.mxu0 0.0
        %660 = vmatpush2.msra.mxu0 0.0
        %661 = vmatprep.subr.mxu0 0.0
        %662 = vmatpush2.msra.mxu0 0.0
        %663 = vmatprep.subr.mxu0 0.0
        %664 = vmatpush2.msra.mxu0 0.0
        %665 = vmatprep.subr.mxu0 0.0
        %666 = vmatpush2.msra.mxu0 0.0
        %667 = vmatprep.subr.mxu0 0.0
        %668 = vmatpush2.msra.mxu0 0.0
        %669 = vmatprep.subr.mxu0 0.0
        %670 = vmatpush2.msra.mxu0 0.0
        %671 = vmatprep.subr.mxu0 0.0
        %672 = vmatpush2.msra.mxu0 0.0
        %673 = vmatprep.mubr.f32.mxu0 0.0
        %674 = vmatmul.mubr.f32.gmra.mxu0 %v607
        %v675 = vpop.f32.mrf.mxu0
        %v676 = vadd.f32 0.0, %v675
        %v677 = vpop.f32.mrf.mxu0
        %678 = vdwg.mxu0
        %680 = vrot.lane.b32.xlu0 %v676, 16
        %v681 = vpop.permute.xlu0 %680
        %v683 = vadd.f32 %v525, %v681
        %684 = vrot.lane.b32.xlu0 %v351, 126
        %v685 = vpop.permute.xlu0 %684
        %v688 = vsel %vm369, %v356, 0
        %690 = vmatprep.subr.mxu0 0.0
        %691 = vmatpush1.msra.mxu0 0.0
        %692 = vmatprep.subr.mxu0 0.0
        %693 = vmatpush1.msra.mxu0 0.0
        %694 = vmatprep.subr.mxu0 0.0
        %695 = vmatpush1.msra.mxu0 0.0
        %696 = vmatprep.subr.mxu0 0.0
        %697 = vmatpush1.msra.mxu0 0.0
        %698 = vmatprep.subr.mxu0 0.0
        %699 = vmatpush1.msra.mxu0 0.0
        %700 = vmatprep.subr.mxu0 0.0
        %701 = vmatpush1.msra.mxu0 0.0
        %702 = vmatprep.subr.mxu0 0.0
        %703 = vmatpush1.msra.mxu0 0.0
        %704 = vmatprep.subr.mxu0 0.0
        %705 = vmatpush1.msra.mxu0 0.0
        %706 = vmatprep.subr.mxu0 0.0
        %707 = vmatpush1.msra.mxu0 0.0
        %708 = vmatprep.subr.mxu0 0.0
        %709 = vmatpush1.msra.mxu0 0.0
        %710 = vmatprep.subr.mxu0 0.0
        %711 = vmatpush1.msra.mxu0 0.0
        %712 = vmatprep.subr.mxu0 0.0
        %713 = vmatpush1.msra.mxu0 0.0
        %714 = vmatprep.subr.mxu0 0.0
        %715 = vmatpush1.msra.mxu0 0.0
        %716 = vmatprep.subr.mxu0 0.0
        %717 = vmatpush1.msra.mxu0 0.0
        %718 = vmatprep.subr.mxu0 0.0
        %719 = vmatpush1.msra.mxu0 0.0
        %720 = vmatprep.subr.mxu0 0.0
        %721 = vmatpush1.msra.mxu0 %v685
        %722 = vmatprep.subr.mxu0 0.0
        %723 = vmatpush2.msra.mxu0 0.0
        %724 = vmatprep.subr.mxu0 0.0
        %725 = vmatpush2.msra.mxu0 0.0
        %726 = vmatprep.subr.mxu0 0.0
        %727 = vmatpush2.msra.mxu0 0.0
        %728 = vmatprep.subr.mxu0 0.0
        %729 = vmatpush2.msra.mxu0 0.0
        %730 = vmatprep.subr.mxu0 0.0
        %731 = vmatpush2.msra.mxu0 0.0
        %732 = vmatprep.subr.mxu0 0.0
        %733 = vmatpush2.msra.mxu0 0.0
        %734 = vmatprep.subr.mxu0 0.0
        %735 = vmatpush2.msra.mxu0 0.0
        %736 = vmatprep.subr.mxu0 0.0
        %737 = vmatpush2.msra.mxu0 0.0
        %738 = vmatprep.subr.mxu0 0.0
        %739 = vmatpush2.msra.mxu0 0.0
        %740 = vmatprep.subr.mxu0 0.0
        %741 = vmatpush2.msra.mxu0 0.0
        %742 = vmatprep.subr.mxu0 0.0
        %743 = vmatpush2.msra.mxu0 0.0
        %744 = vmatprep.subr.mxu0 0.0
        %745 = vmatpush2.msra.mxu0 0.0
        %746 = vmatprep.subr.mxu0 0.0
        %747 = vmatpush2.msra.mxu0 0.0
        %748 = vmatprep.subr.mxu0 0.0
        %749 = vmatpush2.msra.mxu0 0.0
        %750 = vmatprep.subr.mxu0 0.0
        %751 = vmatpush2.msra.mxu0 0.0
        %752 = vmatprep.subr.mxu0 0.0
        %753 = vmatpush2.msra.mxu0 0.0
        %754 = vmatprep.mubr.f32.mxu0 0.0
        %755 = vmatmul.mubr.f32.gmra.mxu0 %v688
        %v756 = vpop.f32.mrf.mxu0
        %v757 = vadd.f32 0.0, %v756
        %v758 = vpop.f32.mrf.mxu0
        %759 = vdwg.mxu0
        %v760 = vadd.f32 %v602, %v757
        %761 = vrot.lane.b32.xlu0 %v351, 104
        %v762 = vpop.permute.xlu0 %761
        %v765 = vsel %vm369, %v363, 0
        %767 = vmatprep.subr.mxu0 0.0
        %768 = vmatpush1.msra.mxu0 0.0
        %769 = vmatprep.subr.mxu0 0.0
        %770 = vmatpush1.msra.mxu0 0.0
        %771 = vmatprep.subr.mxu0 0.0
        %772 = vmatpush1.msra.mxu0 0.0
        %773 = vmatprep.subr.mxu0 0.0
        %774 = vmatpush1.msra.mxu0 0.0
        %775 = vmatprep.subr.mxu0 0.0
        %776 = vmatpush1.msra.mxu0 0.0
        %777 = vmatprep.subr.mxu0 0.0
        %778 = vmatpush1.msra.mxu0 0.0
        %779 = vmatprep.subr.mxu0 0.0
        %780 = vmatpush1.msra.mxu0 0.0
        %781 = vmatprep.subr.mxu0 0.0
        %782 = vmatpush1.msra.mxu0 0.0
        %783 = vmatprep.subr.mxu0 0.0
        %784 = vmatpush1.msra.mxu0 0.0
        %785 = vmatprep.subr.mxu0 0.0
        %786 = vmatpush1.msra.mxu0 0.0
        %787 = vmatprep.subr.mxu0 0.0
        %788 = vmatpush1.msra.mxu0 0.0
        %789 = vmatprep.subr.mxu0 0.0
        %790 = vmatpush1.msra.mxu0 0.0
        %791 = vmatprep.subr.mxu0 0.0
        %792 = vmatpush1.msra.mxu0 0.0
        %793 = vmatprep.subr.mxu0 0.0
        %794 = vmatpush1.msra.mxu0 0.0
        %795 = vmatprep.subr.mxu0 0.0
        %796 = vmatpush1.msra.mxu0 0.0
        %797 = vmatprep.subr.mxu0 0.0
        %798 = vmatpush1.msra.mxu0 %v762
        %799 = vmatprep.subr.mxu0 0.0
        %800 = vmatpush2.msra.mxu0 0.0
        %801 = vmatprep.subr.mxu0 0.0
        %802 = vmatpush2.msra.mxu0 0.0
        %803 = vmatprep.subr.mxu0 0.0
        %804 = vmatpush2.msra.mxu0 0.0
        %805 = vmatprep.subr.mxu0 0.0
        %806 = vmatpush2.msra.mxu0 0.0
        %807 = vmatprep.subr.mxu0 0.0
        %808 = vmatpush2.msra.mxu0 0.0
        %809 = vmatprep.subr.mxu0 0.0
        %810 = vmatpush2.msra.mxu0 0.0
        %811 = vmatprep.subr.mxu0 0.0
        %812 = vmatpush2.msra.mxu0 0.0
        %813 = vmatprep.subr.mxu0 0.0
        %814 = vmatpush2.msra.mxu0 0.0
        %815 = vmatprep.subr.mxu0 0.0
        %816 = vmatpush2.msra.mxu0 0.0
        %817 = vmatprep.subr.mxu0 0.0
        %818 = vmatpush2.msra.mxu0 0.0
        %819 = vmatprep.subr.mxu0 0.0
        %820 = vmatpush2.msra.mxu0 0.0
        %821 = vmatprep.subr.mxu0 0.0
        %822 = vmatpush2.msra.mxu0 0.0
        %823 = vmatprep.subr.mxu0 0.0
        %824 = vmatpush2.msra.mxu0 0.0
        %825 = vmatprep.subr.mxu0 0.0
        %826 = vmatpush2.msra.mxu0 0.0
        %827 = vmatprep.subr.mxu0 0.0
        %828 = vmatpush2.msra.mxu0 0.0
        %829 = vmatprep.subr.mxu0 0.0
        %830 = vmatpush2.msra.mxu0 0.0
        %831 = vmatprep.mubr.f32.mxu0 0.0
        %832 = vmatmul.mubr.f32.gmra.mxu0 %v765
        %v833 = vpop.f32.mrf.mxu0
        %v834 = vadd.f32 0.0, %v833
        %v835 = vpop.f32.mrf.mxu0
        %836 = vdwg.mxu0
        %838 = vrot.lane.b32.xlu0 %v834, 16
        %v839 = vpop.permute.xlu0 %838
        %v841 = vadd.f32 %v683, %v839
        %842 = vrot.lane.b32.xlu0 %v351, 125
        %v843 = vpop.permute.xlu0 %842
        %v846 = vsel %vm369, %v357, 0
        %848 = vmatprep.subr.mxu0 0.0
        %849 = vmatpush1.msra.mxu0 0.0
        %850 = vmatprep.subr.mxu0 0.0
        %851 = vmatpush1.msra.mxu0 0.0
        %852 = vmatprep.subr.mxu0 0.0
        %853 = vmatpush1.msra.mxu0 0.0
        %854 = vmatprep.subr.mxu0 0.0
        %855 = vmatpush1.msra.mxu0 0.0
        %856 = vmatprep.subr.mxu0 0.0
        %857 = vmatpush1.msra.mxu0 0.0
        %858 = vmatprep.subr.mxu0 0.0
        %859 = vmatpush1.msra.mxu0 0.0
        %860 = vmatprep.subr.mxu0 0.0
        %861 = vmatpush1.msra.mxu0 0.0
        %862 = vmatprep.subr.mxu0 0.0
        %863 = vmatpush1.msra.mxu0 0.0
        %864 = vmatprep.subr.mxu0 0.0
        %865 = vmatpush1.msra.mxu0 0.0
        %866 = vmatprep.subr.mxu0 0.0
        %867 = vmatpush1.msra.mxu0 0.0
        %868 = vmatprep.subr.mxu0 0.0
        %869 = vmatpush1.msra.mxu0 0.0
        %870 = vmatprep.subr.mxu0 0.0
        %871 = vmatpush1.msra.mxu0 0.0
        %872 = vmatprep.subr.mxu0 0.0
        %873 = vmatpush1.msra.mxu0 0.0
        %874 = vmatprep.subr.mxu0 0.0
        %875 = vmatpush1.msra.mxu0 0.0
        %876 = vmatprep.subr.mxu0 0.0
        %877 = vmatpush1.msra.mxu0 0.0
        %878 = vmatprep.subr.mxu0 0.0
        %879 = vmatpush1.msra.mxu0 %v843
        %880 = vmatprep.subr.mxu0 0.0
        %881 = vmatpush2.msra.mxu0 0.0
        %882 = vmatprep.subr.mxu0 0.0
        %883 = vmatpush2.msra.mxu0 0.0
        %884 = vmatprep.subr.mxu0 0.0
        %885 = vmatpush2.msra.mxu0 0.0
        %886 = vmatprep.subr.mxu0 0.0
        %887 = vmatpush2.msra.mxu0 0.0
        %888 = vmatprep.subr.mxu0 0.0
        %889 = vmatpush2.msra.mxu0 0.0
        %890 = vmatprep.subr.mxu0 0.0
        %891 = vmatpush2.msra.mxu0 0.0
        %892 = vmatprep.subr.mxu0 0.0
        %893 = vmatpush2.msra.mxu0 0.0
        %894 = vmatprep.subr.mxu0 0.0
        %895 = vmatpush2.msra.mxu0 0.0
        %896 = vmatprep.subr.mxu0 0.0
        %897 = vmatpush2.msra.mxu0 0.0
        %898 = vmatprep.subr.mxu0 0.0
        %899 = vmatpush2.msra.mxu0 0.0
        %900 = vmatprep.subr.mxu0 0.0
        %901 = vmatpush2.msra.mxu0 0.0
        %902 = vmatprep.subr.mxu0 0.0
        %903 = vmatpush2.msra.mxu0 0.0
        %904 = vmatprep.subr.mxu0 0.0
        %905 = vmatpush2.msra.mxu0 0.0
        %906 = vmatprep.subr.mxu0 0.0
        %907 = vmatpush2.msra.mxu0 0.0
        %908 = vmatprep.subr.mxu0 0.0
        %909 = vmatpush2.msra.mxu0 0.0
        %910 = vmatprep.subr.mxu0 0.0
        %911 = vmatpush2.msra.mxu0 0.0
        %912 = vmatprep.mubr.f32.mxu0 0.0
        %913 = vmatmul.mubr.f32.gmra.mxu0 %v846
        %v914 = vpop.f32.mrf.mxu0
        %v915 = vadd.f32 0.0, %v914
        %v916 = vpop.f32.mrf.mxu0
        %917 = vdwg.mxu0
        %v918 = vadd.f32 %v760, %v915
        %919 = vrot.lane.b32.xlu0 %v351, 103
        %v920 = vpop.permute.xlu0 %919
        %v923 = vsel %vm369, %v364, 0
        %925 = vmatprep.subr.mxu0 0.0
        %926 = vmatpush1.msra.mxu0 0.0
        %927 = vmatprep.subr.mxu0 0.0
        %928 = vmatpush1.msra.mxu0 0.0
        %929 = vmatprep.subr.mxu0 0.0
        %930 = vmatpush1.msra.mxu0 0.0
        %931 = vmatprep.subr.mxu0 0.0
        %932 = vmatpush1.msra.mxu0 0.0
        %933 = vmatprep.subr.mxu0 0.0
        %934 = vmatpush1.msra.mxu0 0.0
        %935 = vmatprep.subr.mxu0 0.0
        %936 = vmatpush1.msra.mxu0 0.0
        %937 = vmatprep.subr.mxu0 0.0
        %938 = vmatpush1.msra.mxu0 0.0
        %939 = vmatprep.subr.mxu0 0.0
        %940 = vmatpush1.msra.mxu0 0.0
        %941 = vmatprep.subr.mxu0 0.0
        %942 = vmatpush1.msra.mxu0 0.0
        %943 = vmatprep.subr.mxu0 0.0
        %944 = vmatpush1.msra.mxu0 0.0
        %945 = vmatprep.subr.mxu0 0.0
        %946 = vmatpush1.msra.mxu0 0.0
        %947 = vmatprep.subr.mxu0 0.0
        %948 = vmatpush1.msra.mxu0 0.0
        %949 = vmatprep.subr.mxu0 0.0
        %950 = vmatpush1.msra.mxu0 0.0
        %951 = vmatprep.subr.mxu0 0.0
        %952 = vmatpush1.msra.mxu0 0.0
        %953 = vmatprep.subr.mxu0 0.0
        %954 = vmatpush1.msra.mxu0 0.0
        %955 = vmatprep.subr.mxu0 0.0
        %956 = vmatpush1.msra.mxu0 %v920
        %957 = vmatprep.subr.mxu0 0.0
        %958 = vmatpush2.msra.mxu0 0.0
        %959 = vmatprep.subr.mxu0 0.0
        %960 = vmatpush2.msra.mxu0 0.0
        %961 = vmatprep.subr.mxu0 0.0
        %962 = vmatpush2.msra.mxu0 0.0
        %963 = vmatprep.subr.mxu0 0.0
        %964 = vmatpush2.msra.mxu0 0.0
        %965 = vmatprep.subr.mxu0 0.0
        %966 = vmatpush2.msra.mxu0 0.0
        %967 = vmatprep.subr.mxu0 0.0
        %968 = vmatpush2.msra.mxu0 0.0
        %969 = vmatprep.subr.mxu0 0.0
        %970 = vmatpush2.msra.mxu0 0.0
        %971 = vmatprep.subr.mxu0 0.0
        %972 = vmatpush2.msra.mxu0 0.0
        %973 = vmatprep.subr.mxu0 0.0
        %974 = vmatpush2.msra.mxu0 0.0
        %975 = vmatprep.subr.mxu0 0.0
        %976 = vmatpush2.msra.mxu0 0.0
        %977 = vmatprep.subr.mxu0 0.0
        %978 = vmatpush2.msra.mxu0 0.0
        %979 = vmatprep.subr.mxu0 0.0
        %980 = vmatpush2.msra.mxu0 0.0
        %981 = vmatprep.subr.mxu0 0.0
        %982 = vmatpush2.msra.mxu0 0.0
        %983 = vmatprep.subr.mxu0 0.0
        %984 = vmatpush2.msra.mxu0 0.0
        %985 = vmatprep.subr.mxu0 0.0
        %986 = vmatpush2.msra.mxu0 0.0
        %987 = vmatprep.subr.mxu0 0.0
        %988 = vmatpush2.msra.mxu0 0.0
        %989 = vmatprep.mubr.f32.mxu0 0.0
        %990 = vmatmul.mubr.f32.gmra.mxu0 %v923
        %v991 = vpop.f32.mrf.mxu0
        %v992 = vadd.f32 0.0, %v991
        %v993 = vpop.f32.mrf.mxu0
        %994 = vdwg.mxu0
        %996 = vrot.lane.b32.xlu0 %v992, 16
        %v997 = vpop.permute.xlu0 %996
        %v999 = vadd.f32 %v841, %v997
        %1000 = vrot.lane.b32.xlu0 %v351, 124
        %v1001 = vpop.permute.xlu0 %1000
        %v1004 = vsel %vm369, %v358, 0
        %1006 = vmatprep.subr.mxu0 0.0
        %1007 = vmatpush1.msra.mxu0 0.0
        %1008 = vmatprep.subr.mxu0 0.0
        %1009 = vmatpush1.msra.mxu0 0.0
        %1010 = vmatprep.subr.mxu0 0.0
        %1011 = vmatpush1.msra.mxu0 0.0
        %1012 = vmatprep.subr.mxu0 0.0
        %1013 = vmatpush1.msra.mxu0 0.0
        %1014 = vmatprep.subr.mxu0 0.0
        %1015 = vmatpush1.msra.mxu0 0.0
        %1016 = vmatprep.subr.mxu0 0.0
        %1017 = vmatpush1.msra.mxu0 0.0
        %1018 = vmatprep.subr.mxu0 0.0
        %1019 = vmatpush1.msra.mxu0 0.0
        %1020 = vmatprep.subr.mxu0 0.0
        %1021 = vmatpush1.msra.mxu0 0.0
        %1022 = vmatprep.subr.mxu0 0.0
        %1023 = vmatpush1.msra.mxu0 0.0
        %1024 = vmatprep.subr.mxu0 0.0
        %1025 = vmatpush1.msra.mxu0 0.0
        %1026 = vmatprep.subr.mxu0 0.0
        %1027 = vmatpush1.msra.mxu0 0.0
        %1028 = vmatprep.subr.mxu0 0.0
        %1029 = vmatpush1.msra.mxu0 0.0
        %1030 = vmatprep.subr.mxu0 0.0
        %1031 = vmatpush1.msra.mxu0 0.0
        %1032 = vmatprep.subr.mxu0 0.0
        %1033 = vmatpush1.msra.mxu0 0.0
        %1034 = vmatprep.subr.mxu0 0.0
        %1035 = vmatpush1.msra.mxu0 0.0
        %1036 = vmatprep.subr.mxu0 0.0
        %1037 = vmatpush1.msra.mxu0 %v1001
        %1038 = vmatprep.subr.mxu0 0.0
        %1039 = vmatpush2.msra.mxu0 0.0
        %1040 = vmatprep.subr.mxu0 0.0
        %1041 = vmatpush2.msra.mxu0 0.0
        %1042 = vmatprep.subr.mxu0 0.0
        %1043 = vmatpush2.msra.mxu0 0.0
        %1044 = vmatprep.subr.mxu0 0.0
        %1045 = vmatpush2.msra.mxu0 0.0
        %1046 = vmatprep.subr.mxu0 0.0
        %1047 = vmatpush2.msra.mxu0 0.0
        %1048 = vmatprep.subr.mxu0 0.0
        %1049 = vmatpush2.msra.mxu0 0.0
        %1050 = vmatprep.subr.mxu0 0.0
        %1051 = vmatpush2.msra.mxu0 0.0
        %1052 = vmatprep.subr.mxu0 0.0
        %1053 = vmatpush2.msra.mxu0 0.0
        %1054 = vmatprep.subr.mxu0 0.0
        %1055 = vmatpush2.msra.mxu0 0.0
        %1056 = vmatprep.subr.mxu0 0.0
        %1057 = vmatpush2.msra.mxu0 0.0
        %1058 = vmatprep.subr.mxu0 0.0
        %1059 = vmatpush2.msra.mxu0 0.0
        %1060 = vmatprep.subr.mxu0 0.0
        %1061 = vmatpush2.msra.mxu0 0.0
        %1062 = vmatprep.subr.mxu0 0.0
        %1063 = vmatpush2.msra.mxu0 0.0
        %1064 = vmatprep.subr.mxu0 0.0
        %1065 = vmatpush2.msra.mxu0 0.0
        %1066 = vmatprep.subr.mxu0 0.0
        %1067 = vmatpush2.msra.mxu0 0.0
        %1068 = vmatprep.subr.mxu0 0.0
        %1069 = vmatpush2.msra.mxu0 0.0
        %1070 = vmatprep.mubr.f32.mxu0 0.0
        %1071 = vmatmul.mubr.f32.gmra.mxu0 %v1004
        %v1072 = vpop.f32.mrf.mxu0
        %v1073 = vadd.f32 0.0, %v1072
        %v1074 = vpop.f32.mrf.mxu0
        %1075 = vdwg.mxu0
        %v1076 = vadd.f32 %v918, %v1073
        %1077 = vrot.lane.b32.xlu0 %v351, 102
        %v1078 = vpop.permute.xlu0 %1077
        %v1081 = vsel %vm369, %v365, 0
        %1083 = vmatprep.subr.mxu0 0.0
        %1084 = vmatpush1.msra.mxu0 0.0
        %1085 = vmatprep.subr.mxu0 0.0
        %1086 = vmatpush1.msra.mxu0 0.0
        %1087 = vmatprep.subr.mxu0 0.0
        %1088 = vmatpush1.msra.mxu0 0.0
        %1089 = vmatprep.subr.mxu0 0.0
        %1090 = vmatpush1.msra.mxu0 0.0
        %1091 = vmatprep.subr.mxu0 0.0
        %1092 = vmatpush1.msra.mxu0 0.0
        %1093 = vmatprep.subr.mxu0 0.0
        %1094 = vmatpush1.msra.mxu0 0.0
        %1095 = vmatprep.subr.mxu0 0.0
        %1096 = vmatpush1.msra.mxu0 0.0
        %1097 = vmatprep.subr.mxu0 0.0
        %1098 = vmatpush1.msra.mxu0 0.0
        %1099 = vmatprep.subr.mxu0 0.0
        %1100 = vmatpush1.msra.mxu0 0.0
        %1101 = vmatprep.subr.mxu0 0.0
        %1102 = vmatpush1.msra.mxu0 0.0
        %1103 = vmatprep.subr.mxu0 0.0
        %1104 = vmatpush1.msra.mxu0 0.0
        %1105 = vmatprep.subr.mxu0 0.0
        %1106 = vmatpush1.msra.mxu0 0.0
        %1107 = vmatprep.subr.mxu0 0.0
        %1108 = vmatpush1.msra.mxu0 0.0
        %1109 = vmatprep.subr.mxu0 0.0
        %1110 = vmatpush1.msra.mxu0 0.0
        %1111 = vmatprep.subr.mxu0 0.0
        %1112 = vmatpush1.msra.mxu0 0.0
        %1113 = vmatprep.subr.mxu0 0.0
        %1114 = vmatpush1.msra.mxu0 %v1078
        %1115 = vmatprep.subr.mxu0 0.0
        %1116 = vmatpush2.msra.mxu0 0.0
        %1117 = vmatprep.subr.mxu0 0.0
        %1118 = vmatpush2.msra.mxu0 0.0
        %1119 = vmatprep.subr.mxu0 0.0
        %1120 = vmatpush2.msra.mxu0 0.0
        %1121 = vmatprep.subr.mxu0 0.0
        %1122 = vmatpush2.msra.mxu0 0.0
        %1123 = vmatprep.subr.mxu0 0.0
        %1124 = vmatpush2.msra.mxu0 0.0
        %1125 = vmatprep.subr.mxu0 0.0
        %1126 = vmatpush2.msra.mxu0 0.0
        %1127 = vmatprep.subr.mxu0 0.0
        %1128 = vmatpush2.msra.mxu0 0.0
        %1129 = vmatprep.subr.mxu0 0.0
        %1130 = vmatpush2.msra.mxu0 0.0
        %1131 = vmatprep.subr.mxu0 0.0
        %1132 = vmatpush2.msra.mxu0 0.0
        %1133 = vmatprep.subr.mxu0 0.0
        %1134 = vmatpush2.msra.mxu0 0.0
        %1135 = vmatprep.subr.mxu0 0.0
        %1136 = vmatpush2.msra.mxu0 0.0
        %1137 = vmatprep.subr.mxu0 0.0
        %1138 = vmatpush2.msra.mxu0 0.0
        %1139 = vmatprep.subr.mxu0 0.0
        %1140 = vmatpush2.msra.mxu0 0.0
        %1141 = vmatprep.subr.mxu0 0.0
        %1142 = vmatpush2.msra.mxu0 0.0
        %1143 = vmatprep.subr.mxu0 0.0
        %1144 = vmatpush2.msra.mxu0 0.0
        %1145 = vmatprep.subr.mxu0 0.0
        %1146 = vmatpush2.msra.mxu0 0.0
        %1147 = vmatprep.mubr.f32.mxu0 0.0
        %1148 = vmatmul.mubr.f32.gmra.mxu0 %v1081
        %v1149 = vpop.f32.mrf.mxu0
        %v1150 = vadd.f32 0.0, %v1149
        %v1151 = vpop.f32.mrf.mxu0
        %1152 = vdwg.mxu0
        %1154 = vrot.lane.b32.xlu0 %v1150, 16
        %v1155 = vpop.permute.xlu0 %1154
        %v1157 = vadd.f32 %v999, %v1155
        %1158 = vrot.lane.b32.xlu0 %v351, 123
        %v1159 = vpop.permute.xlu0 %1158
        %v1162 = vsel %vm369, %v359, 0
        %1164 = vmatprep.subr.mxu0 0.0
        %1165 = vmatpush1.msra.mxu0 0.0
        %1166 = vmatprep.subr.mxu0 0.0
        %1167 = vmatpush1.msra.mxu0 0.0
        %1168 = vmatprep.subr.mxu0 0.0
        %1169 = vmatpush1.msra.mxu0 0.0
        %1170 = vmatprep.subr.mxu0 0.0
        %1171 = vmatpush1.msra.mxu0 0.0
        %1172 = vmatprep.subr.mxu0 0.0
        %1173 = vmatpush1.msra.mxu0 0.0
        %1174 = vmatprep.subr.mxu0 0.0
        %1175 = vmatpush1.msra.mxu0 0.0
        %1176 = vmatprep.subr.mxu0 0.0
        %1177 = vmatpush1.msra.mxu0 0.0
        %1178 = vmatprep.subr.mxu0 0.0
        %1179 = vmatpush1.msra.mxu0 0.0
        %1180 = vmatprep.subr.mxu0 0.0
        %1181 = vmatpush1.msra.mxu0 0.0
        %1182 = vmatprep.subr.mxu0 0.0
        %1183 = vmatpush1.msra.mxu0 0.0
        %1184 = vmatprep.subr.mxu0 0.0
        %1185 = vmatpush1.msra.mxu0 0.0
        %1186 = vmatprep.subr.mxu0 0.0
        %1187 = vmatpush1.msra.mxu0 0.0
        %1188 = vmatprep.subr.mxu0 0.0
        %1189 = vmatpush1.msra.mxu0 0.0
        %1190 = vmatprep.subr.mxu0 0.0
        %1191 = vmatpush1.msra.mxu0 0.0
        %1192 = vmatprep.subr.mxu0 0.0
        %1193 = vmatpush1.msra.mxu0 0.0
        %1194 = vmatprep.subr.mxu0 0.0
        %1195 = vmatpush1.msra.mxu0 %v1159
        %1196 = vmatprep.subr.mxu0 0.0
        %1197 = vmatpush2.msra.mxu0 0.0
        %1198 = vmatprep.subr.mxu0 0.0
        %1199 = vmatpush2.msra.mxu0 0.0
        %1200 = vmatprep.subr.mxu0 0.0
        %1201 = vmatpush2.msra.mxu0 0.0
        %1202 = vmatprep.subr.mxu0 0.0
        %1203 = vmatpush2.msra.mxu0 0.0
        %1204 = vmatprep.subr.mxu0 0.0
        %1205 = vmatpush2.msra.mxu0 0.0
        %1206 = vmatprep.subr.mxu0 0.0
        %1207 = vmatpush2.msra.mxu0 0.0
        %1208 = vmatprep.subr.mxu0 0.0
        %1209 = vmatpush2.msra.mxu0 0.0
        %1210 = vmatprep.subr.mxu0 0.0
        %1211 = vmatpush2.msra.mxu0 0.0
        %1212 = vmatprep.subr.mxu0 0.0
        %1213 = vmatpush2.msra.mxu0 0.0
        %1214 = vmatprep.subr.mxu0 0.0
        %1215 = vmatpush2.msra.mxu0 0.0
        %1216 = vmatprep.subr.mxu0 0.0
        %1217 = vmatpush2.msra.mxu0 0.0
        %1218 = vmatprep.subr.mxu0 0.0
        %1219 = vmatpush2.msra.mxu0 0.0
        %1220 = vmatprep.subr.mxu0 0.0
        %1221 = vmatpush2.msra.mxu0 0.0
        %1222 = vmatprep.subr.mxu0 0.0
        %1223 = vmatpush2.msra.mxu0 0.0
        %1224 = vmatprep.subr.mxu0 0.0
        %1225 = vmatpush2.msra.mxu0 0.0
        %1226 = vmatprep.subr.mxu0 0.0
        %1227 = vmatpush2.msra.mxu0 0.0
        %1228 = vmatprep.mubr.f32.mxu0 0.0
        %1229 = vmatmul.mubr.f32.gmra.mxu0 %v1162
        %v1230 = vpop.f32.mrf.mxu0
        %v1231 = vadd.f32 0.0, %v1230
        %v1232 = vpop.f32.mrf.mxu0
        %1233 = vdwg.mxu0
        %v1234 = vadd.f32 %v1076, %v1231
        %1235 = vrot.lane.b32.xlu0 %v351, 101
        %v1236 = vpop.permute.xlu0 %1235
        %v1239 = vsel %vm369, %v366, 0
        %1241 = vmatprep.subr.mxu0 0.0
        %1242 = vmatpush1.msra.mxu0 0.0
        %1243 = vmatprep.subr.mxu0 0.0
        %1244 = vmatpush1.msra.mxu0 0.0
        %1245 = vmatprep.subr.mxu0 0.0
        %1246 = vmatpush1.msra.mxu0 0.0
        %1247 = vmatprep.subr.mxu0 0.0
        %1248 = vmatpush1.msra.mxu0 0.0
        %1249 = vmatprep.subr.mxu0 0.0
        %1250 = vmatpush1.msra.mxu0 0.0
        %1251 = vmatprep.subr.mxu0 0.0
        %1252 = vmatpush1.msra.mxu0 0.0
        %1253 = vmatprep.subr.mxu0 0.0
        %1254 = vmatpush1.msra.mxu0 0.0
        %1255 = vmatprep.subr.mxu0 0.0
        %1256 = vmatpush1.msra.mxu0 0.0
        %1257 = vmatprep.subr.mxu0 0.0
        %1258 = vmatpush1.msra.mxu0 0.0
        %1259 = vmatprep.subr.mxu0 0.0
        %1260 = vmatpush1.msra.mxu0 0.0
        %1261 = vmatprep.subr.mxu0 0.0
        %1262 = vmatpush1.msra.mxu0 0.0
        %1263 = vmatprep.subr.mxu0 0.0
        %1264 = vmatpush1.msra.mxu0 0.0
        %1265 = vmatprep.subr.mxu0 0.0
        %1266 = vmatpush1.msra.mxu0 0.0
        %1267 = vmatprep.subr.mxu0 0.0
        %1268 = vmatpush1.msra.mxu0 0.0
        %1269 = vmatprep.subr.mxu0 0.0
        %1270 = vmatpush1.msra.mxu0 0.0
        %1271 = vmatprep.subr.mxu0 0.0
        %1272 = vmatpush1.msra.mxu0 %v1236
        %1273 = vmatprep.subr.mxu0 0.0
        %1274 = vmatpush2.msra.mxu0 0.0
        %1275 = vmatprep.subr.mxu0 0.0
        %1276 = vmatpush2.msra.mxu0 0.0
        %1277 = vmatprep.subr.mxu0 0.0
        %1278 = vmatpush2.msra.mxu0 0.0
        %1279 = vmatprep.subr.mxu0 0.0
        %1280 = vmatpush2.msra.mxu0 0.0
        %1281 = vmatprep.subr.mxu0 0.0
        %1282 = vmatpush2.msra.mxu0 0.0
        %1283 = vmatprep.subr.mxu0 0.0
        %1284 = vmatpush2.msra.mxu0 0.0
        %1285 = vmatprep.subr.mxu0 0.0
        %1286 = vmatpush2.msra.mxu0 0.0
        %1287 = vmatprep.subr.mxu0 0.0
        %1288 = vmatpush2.msra.mxu0 0.0
        %1289 = vmatprep.subr.mxu0 0.0
        %1290 = vmatpush2.msra.mxu0 0.0
        %1291 = vmatprep.subr.mxu0 0.0
        %1292 = vmatpush2.msra.mxu0 0.0
        %1293 = vmatprep.subr.mxu0 0.0
        %1294 = vmatpush2.msra.mxu0 0.0
        %1295 = vmatprep.subr.mxu0 0.0
        %1296 = vmatpush2.msra.mxu0 0.0
        %1297 = vmatprep.subr.mxu0 0.0
        %1298 = vmatpush2.msra.mxu0 0.0
        %1299 = vmatprep.subr.mxu0 0.0
        %1300 = vmatpush2.msra.mxu0 0.0
        %1301 = vmatprep.subr.mxu0 0.0
        %1302 = vmatpush2.msra.mxu0 0.0
        %1303 = vmatprep.subr.mxu0 0.0
        %1304 = vmatpush2.msra.mxu0 0.0
        %1305 = vmatprep.mubr.f32.mxu0 0.0
        %1306 = vmatmul.mubr.f32.gmra.mxu0 %v1239
        %v1307 = vpop.f32.mrf.mxu0
        %v1308 = vadd.f32 0.0, %v1307
        %v1309 = vpop.f32.mrf.mxu0
        %1310 = vdwg.mxu0
        %1312 = vrot.lane.b32.xlu0 %v1308, 16
        %v1313 = vpop.permute.xlu0 %1312
        %v1315 = vadd.f32 %v1157, %v1313
        %1316 = vrot.lane.b32.xlu0 %v351, 122
        %v1317 = vpop.permute.xlu0 %1316
        %v1320 = vsel %vm369, %v360, 0
        %1322 = vmatprep.subr.mxu0 0.0
        %1323 = vmatpush1.msra.mxu0 0.0
        %1324 = vmatprep.subr.mxu0 0.0
        %1325 = vmatpush1.msra.mxu0 0.0
        %1326 = vmatprep.subr.mxu0 0.0
        %1327 = vmatpush1.msra.mxu0 0.0
        %1328 = vmatprep.subr.mxu0 0.0
        %1329 = vmatpush1.msra.mxu0 0.0
        %1330 = vmatprep.subr.mxu0 0.0
        %1331 = vmatpush1.msra.mxu0 0.0
        %1332 = vmatprep.subr.mxu0 0.0
        %1333 = vmatpush1.msra.mxu0 0.0
        %1334 = vmatprep.subr.mxu0 0.0
        %1335 = vmatpush1.msra.mxu0 0.0
        %1336 = vmatprep.subr.mxu0 0.0
        %1337 = vmatpush1.msra.mxu0 0.0
        %1338 = vmatprep.subr.mxu0 0.0
        %1339 = vmatpush1.msra.mxu0 0.0
        %1340 = vmatprep.subr.mxu0 0.0
        %1341 = vmatpush1.msra.mxu0 0.0
        %1342 = vmatprep.subr.mxu0 0.0
        %1343 = vmatpush1.msra.mxu0 0.0
        %1344 = vmatprep.subr.mxu0 0.0
        %1345 = vmatpush1.msra.mxu0 0.0
        %1346 = vmatprep.subr.mxu0 0.0
        %1347 = vmatpush1.msra.mxu0 0.0
        %1348 = vmatprep.subr.mxu0 0.0
        %1349 = vmatpush1.msra.mxu0 0.0
        %1350 = vmatprep.subr.mxu0 0.0
        %1351 = vmatpush1.msra.mxu0 0.0
        %1352 = vmatprep.subr.mxu0 0.0
        %1353 = vmatpush1.msra.mxu0 %v1317
        %1354 = vmatprep.subr.mxu0 0.0
        %1355 = vmatpush2.msra.mxu0 0.0
        %1356 = vmatprep.subr.mxu0 0.0
        %1357 = vmatpush2.msra.mxu0 0.0
        %1358 = vmatprep.subr.mxu0 0.0
        %1359 = vmatpush2.msra.mxu0 0.0
        %1360 = vmatprep.subr.mxu0 0.0
        %1361 = vmatpush2.msra.mxu0 0.0
        %1362 = vmatprep.subr.mxu0 0.0
        %1363 = vmatpush2.msra.mxu0 0.0
        %1364 = vmatprep.subr.mxu0 0.0
        %1365 = vmatpush2.msra.mxu0 0.0
        %1366 = vmatprep.subr.mxu0 0.0
        %1367 = vmatpush2.msra.mxu0 0.0
        %1368 = vmatprep.subr.mxu0 0.0
        %1369 = vmatpush2.msra.mxu0 0.0
        %1370 = vmatprep.subr.mxu0 0.0
        %1371 = vmatpush2.msra.mxu0 0.0
        %1372 = vmatprep.subr.mxu0 0.0
        %1373 = vmatpush2.msra.mxu0 0.0
        %1374 = vmatprep.subr.mxu0 0.0
        %1375 = vmatpush2.msra.mxu0 0.0
        %1376 = vmatprep.subr.mxu0 0.0
        %1377 = vmatpush2.msra.mxu0 0.0
        %1378 = vmatprep.subr.mxu0 0.0
        %1379 = vmatpush2.msra.mxu0 0.0
        %1380 = vmatprep.subr.mxu0 0.0
        %1381 = vmatpush2.msra.mxu0 0.0
        %1382 = vmatprep.subr.mxu0 0.0
        %1383 = vmatpush2.msra.mxu0 0.0
        %1384 = vmatprep.subr.mxu0 0.0
        %1385 = vmatpush2.msra.mxu0 0.0
        %1386 = vmatprep.mubr.f32.mxu0 0.0
        %1387 = vmatmul.mubr.f32.gmra.mxu0 %v1320
        %v1388 = vpop.f32.mrf.mxu0
        %v1389 = vadd.f32 0.0, %v1388
        %v1390 = vpop.f32.mrf.mxu0
        %1391 = vdwg.mxu0
        %v1392 = vadd.f32 %v1234, %v1389
        %1393 = vrot.lane.b32.xlu0 %v351, 100
        %v1394 = vpop.permute.xlu0 %1393
        %v1397 = vsel %vm369, %v367, 0
        %1399 = vmatprep.subr.mxu0 0.0
        %1400 = vmatpush1.msra.mxu0 0.0
        %1401 = vmatprep.subr.mxu0 0.0
        %1402 = vmatpush1.msra.mxu0 0.0
        %1403 = vmatprep.subr.mxu0 0.0
        %1404 = vmatpush1.msra.mxu0 0.0
        %1405 = vmatprep.subr.mxu0 0.0
        %1406 = vmatpush1.msra.mxu0 0.0
        %1407 = vmatprep.subr.mxu0 0.0
        %1408 = vmatpush1.msra.mxu0 0.0
        %1409 = vmatprep.subr.mxu0 0.0
        %1410 = vmatpush1.msra.mxu0 0.0
        %1411 = vmatprep.subr.mxu0 0.0
        %1412 = vmatpush1.msra.mxu0 0.0
        %1413 = vmatprep.subr.mxu0 0.0
        %1414 = vmatpush1.msra.mxu0 0.0
        %1415 = vmatprep.subr.mxu0 0.0
        %1416 = vmatpush1.msra.mxu0 0.0
        %1417 = vmatprep.subr.mxu0 0.0
        %1418 = vmatpush1.msra.mxu0 0.0
        %1419 = vmatprep.subr.mxu0 0.0
        %1420 = vmatpush1.msra.mxu0 0.0
        %1421 = vmatprep.subr.mxu0 0.0
        %1422 = vmatpush1.msra.mxu0 0.0
        %1423 = vmatprep.subr.mxu0 0.0
        %1424 = vmatpush1.msra.mxu0 0.0
        %1425 = vmatprep.subr.mxu0 0.0
        %1426 = vmatpush1.msra.mxu0 0.0
        %1427 = vmatprep.subr.mxu0 0.0
        %1428 = vmatpush1.msra.mxu0 0.0
        %1429 = vmatprep.subr.mxu0 0.0
        %1430 = vmatpush1.msra.mxu0 %v1394
        %1431 = vmatprep.subr.mxu0 0.0
        %1432 = vmatpush2.msra.mxu0 0.0
        %1433 = vmatprep.subr.mxu0 0.0
        %1434 = vmatpush2.msra.mxu0 0.0
        %1435 = vmatprep.subr.mxu0 0.0
        %1436 = vmatpush2.msra.mxu0 0.0
        %1437 = vmatprep.subr.mxu0 0.0
        %1438 = vmatpush2.msra.mxu0 0.0
        %1439 = vmatprep.subr.mxu0 0.0
        %1440 = vmatpush2.msra.mxu0 0.0
        %1441 = vmatprep.subr.mxu0 0.0
        %1442 = vmatpush2.msra.mxu0 0.0
        %1443 = vmatprep.subr.mxu0 0.0
        %1444 = vmatpush2.msra.mxu0 0.0
        %1445 = vmatprep.subr.mxu0 0.0
        %1446 = vmatpush2.msra.mxu0 0.0
        %1447 = vmatprep.subr.mxu0 0.0
        %1448 = vmatpush2.msra.mxu0 0.0
        %1449 = vmatprep.subr.mxu0 0.0
        %1450 = vmatpush2.msra.mxu0 0.0
        %1451 = vmatprep.subr.mxu0 0.0
        %1452 = vmatpush2.msra.mxu0 0.0
        %1453 = vmatprep.subr.mxu0 0.0
        %1454 = vmatpush2.msra.mxu0 0.0
        %1455 = vmatprep.subr.mxu0 0.0
        %1456 = vmatpush2.msra.mxu0 0.0
        %1457 = vmatprep.subr.mxu0 0.0
        %1458 = vmatpush2.msra.mxu0 0.0
        %1459 = vmatprep.subr.mxu0 0.0
        %1460 = vmatpush2.msra.mxu0 0.0
        %1461 = vmatprep.subr.mxu0 0.0
        %1462 = vmatpush2.msra.mxu0 0.0
        %1463 = vmatprep.mubr.f32.mxu0 0.0
        %1464 = vmatmul.mubr.f32.gmra.mxu0 %v1397
        %v1465 = vpop.f32.mrf.mxu0
        %v1466 = vadd.f32 0.0, %v1465
        %v1467 = vpop.f32.mrf.mxu0
        %1468 = vdwg.mxu0
        %1470 = vrot.lane.b32.xlu0 %v1466, 16
        %v1471 = vpop.permute.xlu0 %1470
        %v1473 = vadd.f32 %v1315, %v1471
        %v1474 = vxor.u32 %v1392, 2147483648
        %v1475 = vmul.f32 %v1474, 1.442695
        %v1476 = vpow.pop %v1475
        %v1477 = vadd.f32 %v1476, 1.0
        %v1478 = vrcp.pop %v1477
        %v1479 = vmul.f32 1.0, %v1478
        %v1480 = vxor.u32 %v1473, 2147483648
        %v1481 = vmul.f32 %v1480, 1.442695
        %v1482 = vpow.pop %v1481
        %v1483 = vadd.f32 %v1482, 1.0
        %v1484 = vrcp.pop %v1483
        %v1485 = vmul.f32 1.0, %v1484
        %v1486 = vld [vmem:[%s4] sm:$0xff]
        %v1487 = vld [vmem:[%s4 + $0x8] sm:$0xff]
        %v1488 = vld [vmem:[%s4 + $0x10] sm:$0xff]
        %v1489 = vld [vmem:[%s4 + $0x18] sm:$0xff]
        %v1490 = vld [vmem:[%s5] sm:$0xff]
        %v1491 = vld [vmem:[%s5 + $0x8] sm:$0xff]
        %v1492 = vld [vmem:[%s5 + $0x10] sm:$0xff]
        %v1493 = vld [vmem:[%s5 + $0x18] sm:$0xff]
        %1495 = vrot.lane.b32.xlu0 %v1485, 112
        %v1496 = vpop.permute.xlu0 %1495
        %vm1497 = vcmask 130048
        %v1498 = vsel %vm1497, %v1496, 0
        %1500 = vmatprep.subr.mxu0 0.0
        %1501 = vmatpush1.msra.mxu0 0.0
        %1502 = vmatprep.subr.mxu0 0.0
        %1503 = vmatpush1.msra.mxu0 0.0
        %1504 = vmatprep.subr.mxu0 0.0
        %1505 = vmatpush1.msra.mxu0 0.0
        %1506 = vmatprep.subr.mxu0 0.0
        %1507 = vmatpush1.msra.mxu0 0.0
        %1508 = vmatprep.subr.mxu0 0.0
        %1509 = vmatpush1.msra.mxu0 0.0
        %1510 = vmatprep.subr.mxu0 0.0
        %1511 = vmatpush1.msra.mxu0 0.0
        %1512 = vmatprep.subr.mxu0 0.0
        %1513 = vmatpush1.msra.mxu0 0.0
        %1514 = vmatprep.subr.mxu0 0.0
        %1515 = vmatpush1.msra.mxu0 0.0
        %1516 = vmatprep.subr.mxu0 0.0
        %1517 = vmatpush1.msra.mxu0 0.0
        %1518 = vmatprep.subr.mxu0 0.0
        %1519 = vmatpush1.msra.mxu0 0.0
        %1520 = vmatprep.subr.mxu0 0.0
        %1521 = vmatpush1.msra.mxu0 0.0
        %1522 = vmatprep.subr.mxu0 0.0
        %1523 = vmatpush1.msra.mxu0 0.0
        %1524 = vmatprep.subr.mxu0 0.0
        %1525 = vmatpush1.msra.mxu0 0.0
        %1526 = vmatprep.subr.mxu0 0.0
        %1527 = vmatpush1.msra.mxu0 0.0
        %1528 = vmatprep.subr.mxu0 %v1493
        %1529 = vmatpush1.msra.mxu0 %v1492
        %1530 = vmatprep.subr.mxu0 %v1491
        %1531 = vmatpush1.msra.mxu0 %v1490
        %1532 = vmatprep.subr.mxu0 0.0
        %1533 = vmatpush2.msra.mxu0 0.0
        %1534 = vmatprep.subr.mxu0 0.0
        %1535 = vmatpush2.msra.mxu0 0.0
        %1536 = vmatprep.subr.mxu0 0.0
        %1537 = vmatpush2.msra.mxu0 0.0
        %1538 = vmatprep.subr.mxu0 0.0
        %1539 = vmatpush2.msra.mxu0 0.0
        %1540 = vmatprep.subr.mxu0 0.0
        %1541 = vmatpush2.msra.mxu0 0.0
        %1542 = vmatprep.subr.mxu0 0.0
        %1543 = vmatpush2.msra.mxu0 0.0
        %1544 = vmatprep.subr.mxu0 0.0
        %1545 = vmatpush2.msra.mxu0 0.0
        %1546 = vmatprep.subr.mxu0 0.0
        %1547 = vmatpush2.msra.mxu0 0.0
        %1548 = vmatprep.subr.mxu0 0.0
        %1549 = vmatpush2.msra.mxu0 0.0
        %1550 = vmatprep.subr.mxu0 0.0
        %1551 = vmatpush2.msra.mxu0 0.0
        %1552 = vmatprep.subr.mxu0 0.0
        %1553 = vmatpush2.msra.mxu0 0.0
        %1554 = vmatprep.subr.mxu0 0.0
        %1555 = vmatpush2.msra.mxu0 0.0
        %1556 = vmatprep.subr.mxu0 0.0
        %1557 = vmatpush2.msra.mxu0 0.0
        %1558 = vmatprep.subr.mxu0 0.0
        %1559 = vmatpush2.msra.mxu0 0.0
        %1560 = vmatprep.subr.mxu0 0.0
        %1561 = vmatpush2.msra.mxu0 0.0
        %1562 = vmatprep.subr.mxu0 0.0
        %1563 = vmatpush2.msra.mxu0 0.0
        %1564 = vmatprep.mubr.f32.mxu0 0.0
        %1565 = vmatmul.mubr.f32.gmra.mxu0 %v1498
        %v1566 = vpop.f32.mrf.mxu0
        %v1567 = vadd.f32 0.0, %v1566
        %v1568 = vpop.f32.mrf.mxu0
        %v1569 = vadd.f32 0.0, %v1568
        %1570 = vdwg.mxu0
        %v1572 = vsel %vm1497, %v1479, 0
        %1574 = vmatprep.subr.mxu0 0.0
        %1575 = vmatpush1.msra.mxu0 0.0
        %1576 = vmatprep.subr.mxu0 0.0
        %1577 = vmatpush1.msra.mxu0 0.0
        %1578 = vmatprep.subr.mxu0 0.0
        %1579 = vmatpush1.msra.mxu0 0.0
        %1580 = vmatprep.subr.mxu0 0.0
        %1581 = vmatpush1.msra.mxu0 0.0
        %1582 = vmatprep.subr.mxu0 0.0
        %1583 = vmatpush1.msra.mxu0 0.0
        %1584 = vmatprep.subr.mxu0 0.0
        %1585 = vmatpush1.msra.mxu0 0.0
        %1586 = vmatprep.subr.mxu0 0.0
        %1587 = vmatpush1.msra.mxu0 0.0
        %1588 = vmatprep.subr.mxu0 0.0
        %1589 = vmatpush1.msra.mxu0 0.0
        %1590 = vmatprep.subr.mxu0 0.0
        %1591 = vmatpush1.msra.mxu0 0.0
        %1592 = vmatprep.subr.mxu0 0.0
        %1593 = vmatpush1.msra.mxu0 0.0
        %1594 = vmatprep.subr.mxu0 0.0
        %1595 = vmatpush1.msra.mxu0 0.0
        %1596 = vmatprep.subr.mxu0 0.0
        %1597 = vmatpush1.msra.mxu0 0.0
        %1598 = vmatprep.subr.mxu0 0.0
        %1599 = vmatpush1.msra.mxu0 0.0
        %1600 = vmatprep.subr.mxu0 0.0
        %1601 = vmatpush1.msra.mxu0 0.0
        %1602 = vmatprep.subr.mxu0 %v1489
        %1603 = vmatpush1.msra.mxu0 %v1488
        %1604 = vmatprep.subr.mxu0 %v1487
        %1605 = vmatpush1.msra.mxu0 %v1486
        %1606 = vmatprep.subr.mxu0 0.0
        %1607 = vmatpush2.msra.mxu0 0.0
        %1608 = vmatprep.subr.mxu0 0.0
        %1609 = vmatpush2.msra.mxu0 0.0
        %1610 = vmatprep.subr.mxu0 0.0
        %1611 = vmatpush2.msra.mxu0 0.0
        %1612 = vmatprep.subr.mxu0 0.0
        %1613 = vmatpush2.msra.mxu0 0.0
        %1614 = vmatprep.subr.mxu0 0.0
        %1615 = vmatpush2.msra.mxu0 0.0
        %1616 = vmatprep.subr.mxu0 0.0
        %1617 = vmatpush2.msra.mxu0 0.0
        %1618 = vmatprep.subr.mxu0 0.0
        %1619 = vmatpush2.msra.mxu0 0.0
        %1620 = vmatprep.subr.mxu0 0.0
        %1621 = vmatpush2.msra.mxu0 0.0
        %1622 = vmatprep.subr.mxu0 0.0
        %1623 = vmatpush2.msra.mxu0 0.0
        %1624 = vmatprep.subr.mxu0 0.0
        %1625 = vmatpush2.msra.mxu0 0.0
        %1626 = vmatprep.subr.mxu0 0.0
        %1627 = vmatpush2.msra.mxu0 0.0
        %1628 = vmatprep.subr.mxu0 0.0
        %1629 = vmatpush2.msra.mxu0 0.0
        %1630 = vmatprep.subr.mxu0 0.0
        %1631 = vmatpush2.msra.mxu0 0.0
        %1632 = vmatprep.subr.mxu0 0.0
        %1633 = vmatpush2.msra.mxu0 0.0
        %1634 = vmatprep.subr.mxu0 0.0
        %1635 = vmatpush2.msra.mxu0 0.0
        %1636 = vmatprep.subr.mxu0 0.0
        %1637 = vmatpush2.msra.mxu0 0.0
        %1638 = vmatprep.mubr.f32.mxu0 0.0
        %1639 = vmatmul.mubr.f32.gmra.mxu0 %v1572
        %v1640 = vpop.f32.mrf.mxu0
        %v1641 = vadd.f32 %v1567, %v1640
        %v1642 = vpop.f32.mrf.mxu0
        %v1643 = vadd.f32 %v1569, %v1642
        %1644 = vdwg.mxu0
        %v1645 = vmul.f32 %v250, %v1641
        %v1646 = vmul.f32 %v251, %v1643
        %1647 = vst [vmem:[%s244] sm:$0xff] %v1645
        %1648 = vst [vmem:[%s244 + $0x8] sm:$0xff] %v1646
        %s1649 = sand.u32 %s159, 1
        %s1650 = scalar_lea.sflag [#allocation3], %s1649
        %s1651 = sand.u32 %s159, 1
        %s1652 = smul.addr %s1651, 16
        %s1653 = scalar_lea.vmem [#allocation2], %s1652
        // Predicated region
        $region45: #{tpu_custom_call.1} parent=43 // pred_check
          %p1654 = pneg %p169
        $region46: #{tpu_custom_call.1} parent=43 // pred_check_branch
          %1656 = sbr.rel (%p1654) target = $region48
        $region47: #{tpu_custom_call.1} parent=43 // pred_region
          %s1658 = ssub.s32 256, 256
          %1659 = vsyncadd %s1650, %s1658
          %s1660 = smul.addr %s20, 2
          %s1661 = smul.addr %s1660, 128
          %s1662 = scalar_lea.hbm %s6, %s1661
          %s1664 = sshll.u32 %s1653, 4
          %s1665 = int_to_ptr.vmem [resolvable:$true] %s1664
          %1667 = dma.vmem_to_hbm [thread:$0]  %s1665, 256, %s1662, %s1650
        $region48: #{tpu_custom_call.1} parent=43 // pred_fallthru
          _
      $region44: #{tpu_custom_call.1} parent=5 // pred_fallthru
        _
      %p1668 = scmp.le.s32.totalorder 2, %s15
      // Predicated region
      $region49: #{tpu_custom_call.1} parent=5 // pred_check
        %p1669 = pneg %p1668
      $region50: #{tpu_custom_call.1} parent=5 // pred_check_branch
        %1671 = sbr.rel (%p1669) target = $region52
      $region51: #{tpu_custom_call.1} parent=5 // pred_region
        %s1672 = ssub.s32 %s15, 2
        // Predicated region
        $region53: #{tpu_custom_call.1} parent=51 // pred_check
          %p1673 = pneg %p175
        $region54: #{tpu_custom_call.1} parent=51 // pred_check_branch
          %1675 = sbr.rel (%p1673) target = $region56
        $region55: #{tpu_custom_call.1} parent=51 // pred_region
          %s1676 = sand.u32 %s160, 1
          %s1677 = scalar_lea.sflag [#allocation3], %s1676
          %s1678 = sand.u32 %s160, 1
          %s1679 = smul.addr %s1678, 16
          %s1680 = scalar_lea.vmem [#allocation2], %s1679
          %1681 = dma.done %s1677, 256
        $region56: #{tpu_custom_call.1} parent=51 // pred_fallthru
          _
      $region52: #{tpu_custom_call.1} parent=5 // pred_fallthru
        _
    $region6: #{tpu_custom_call.1} parent=1 // loop_footer
      %s19 = sadd.s32 1, %s15
    $region7: #{tpu_custom_call.1} parent=1 // loop_footer_branch
      %14 = sbr.rel target = $region3
    $region8: #{tpu_custom_call.1} parent=1 // loop_exit
      _
    %1682 = vsyncpa [#allocation3], 1
    %s1683 = scalar_lea.sflag [#allocation3], 1
    %1684 = vsyncpa %s1683, 1

</llo_original>
